<compile_context>
chip_gen: v6e
topology: v6e:2x2x1
jax: 0.10.0
libtpu: 0.0.40
codegen_flags: <defaults>
</compile_context>

<pallas_src>
import math

import jax
import jax.numpy as jnp
from jax.experimental import pallas as pl
from jax.experimental.pallas import tpu as pltpu

# --- config (mirrors the PyTorch Config) ---
N_EMBD = 32
N_HIDDEN = 4 * N_EMBD         # 128
N_HEADS = 2
HEAD_DIM = N_EMBD // N_HEADS  # 16
W_BLOCK = 16                  # w_block_size (sequence length of the word block)
LN_EPS = 1e-5


def _layernorm_f32(x, gamma, beta):
    mu = jnp.mean(x, axis=-1, keepdims=True)
    var = jnp.mean(jnp.square(x - mu), axis=-1, keepdims=True)
    return (x - mu) * jax.lax.rsqrt(var + LN_EPS) * gamma + beta


def _gelu_exact(x):
    # Exact (erf-based) GELU; erf via Abramowitz-Stegun 7.1.26 (|err| < 1.5e-7) so it
    # lowers to VPU adds/muls + one EUP exp on all TPU generations (no erf primitive).
    z = x * 0.7071067811865476          # x / sqrt(2)
    az = jnp.abs(z)
    t = 1.0 / (1.0 + 0.3275911 * az)
    poly = t * (0.254829592 + t * (-0.284496736 + t * (1.421413741
               + t * (-1.453152027 + t * 1.061405429))))
    erf_abs = 1.0 - poly * jnp.exp(-az * az)
    erf_z = jnp.where(z >= 0.0, erf_abs, -erf_abs)
    return 0.5 * x * (1.0 + erf_z)


def w_block_kernel(x_ref,
                   ln1_g_ref, ln1_b_ref, w_attn_ref, w_aproj_ref,
                   ln2_g_ref, ln2_b_ref, w_fc_ref, w_proj_ref,
                   o_ref):
    bt, W, C = x_ref.shape
    rows = bt * W

    # Flatten (batch_tile, W) -> rows (leading-dim merge only; no lane relayout).
    x = x_ref[...].reshape(rows, C)                                  # (rows, C) f32

    # ---- LayerNorm 1 (f32) ----
    h = _layernorm_f32(x, ln1_g_ref[0], ln1_b_ref[0])

    # ---- QKV projection: bf16 MXU operands, f32 accumulation.
    # 1/sqrt(head_dim) is already folded into the Q columns of w_attn.
    qkv = jnp.dot(h.astype(jnp.bfloat16), w_attn_ref[...],
                  preferred_element_type=jnp.float32)                # (rows, 3C) f32
    q3 = qkv[:, 0 * C:1 * C].astype(jnp.bfloat16).reshape(bt, W, C)
    k3 = qkv[:, 1 * C:2 * C].astype(jnp.bfloat16).reshape(bt, W, C)
    v3 = qkv[:, 2 * C:3 * C].astype(jnp.bfloat16).reshape(bt, W, C)

    # Causal additive mask, built once per grid step (every row has its diagonal
    # unmasked, so exp(-inf - finite) = 0 and no NaNs can appear).
    row_ids = jax.lax.broadcasted_iota(jnp.int32, (W, W), 0)
    col_ids = jax.lax.broadcasted_iota(jnp.int32, (W, W), 1)
    neg_mask = jnp.where(col_ids <= row_ids, 0.0, -jnp.inf).astype(jnp.float32)

    # Head-lane mask: head h occupies lanes [h*HEAD_DIM, (h+1)*HEAD_DIM).
    lane_c = jax.lax.broadcasted_iota(jnp.int32, (1, 1, C), 2)

    # ---- causal multi-head attention, batched over the batch tile ----
    # Lane-masked full-width (K=C) score/value matmuls: masked-out lanes contribute 0,
    # so no 16-lane slice extraction is needed and each head's output lands directly in
    # its own lane range of `att` -> one K=C output projection afterwards.
    att = jnp.zeros((bt, W, C), jnp.float32)
    for hidx in range(N_HEADS):
        in_head = (lane_c >= hidx * HEAD_DIM) & (lane_c < (hidx + 1) * HEAD_DIM)
        qh = jnp.where(in_head, q3, jnp.zeros_like(q3))
        vh = jnp.where(in_head, v3, jnp.zeros_like(v3))

        s = jnp.einsum("bqc,bkc->bqk", qh, k3,
                       preferred_element_type=jnp.float32) + neg_mask   # (bt, W, W) f32
        m = jnp.max(s, axis=-1, keepdims=True)
        p = jnp.exp(s - m)
        denom = jnp.sum(p, axis=-1, keepdims=True)
        p = (p * pl.reciprocal(denom, approx=True)).astype(jnp.bfloat16)  # EUP rcp

        att = att + jnp.einsum("bqk,bkc->bqc", p, vh,
                               preferred_element_type=jnp.float32)       # (bt, W, C)

    # Single K=C output projection over all rows (bf16 operands, f32 accumulation).
    att_proj = jnp.dot(att.reshape(rows, C).astype(jnp.bfloat16), w_aproj_ref[...],
                       preferred_element_type=jnp.float32)

    # dropout: identity (inference)
    x1 = x + att_proj                                                # residual 1 (f32)

    # ---- LayerNorm 2 + MLP ----
    h2 = _layernorm_f32(x1, ln2_g_ref[0], ln2_b_ref[0])
    fc = jnp.dot(h2.astype(jnp.bfloat16), w_fc_ref[...],
                 preferred_element_type=jnp.float32)                 # (rows, 4C)
    fc = _gelu_exact(fc)
    mlp = jnp.dot(fc.astype(jnp.bfloat16), w_proj_ref[...],
                  preferred_element_type=jnp.float32)                # (rows, C)

    # dropout: identity (inference)
    o_ref[...] = (x1 + mlp).reshape(bt, W, C).astype(o_ref.dtype)


def prepare_kernel_params(params):
    """One-time parameter transform for the kernel: fold 1/sqrt(head_dim) into the Q
    columns of w_attn and cast MXU-operand weights to bf16; LayerNorm params stay f32."""
    scale = 1.0 / math.sqrt(HEAD_DIM)
    w_attn = params["w_attn"].at[:, :N_EMBD].multiply(scale)
    return {
        "ln1_g": params["ln1_g"].astype(jnp.float32),
        "ln1_b": params["ln1_b"].astype(jnp.float32),
        "w_attn": w_attn.astype(jnp.bfloat16),
        "w_aproj": params["w_aproj"].astype(jnp.bfloat16),
        "ln2_g": params["ln2_g"].astype(jnp.float32),
        "ln2_b": params["ln2_b"].astype(jnp.float32),
        "w_fc": params["w_fc"].astype(jnp.bfloat16),
        "w_proj": params["w_proj"].astype(jnp.bfloat16),
    }


def w_block_forward(x, kparams, *, b_tile=128):
    """x: (B, W_BLOCK, N_EMBD) f32.  kparams: output of prepare_kernel_params."""
    B, W, C = x.shape
    assert (W, C) == (W_BLOCK, N_EMBD)

    # Tile-size selection: amortize per-step overhead with a large batch tile, but
    #  * keep >= 2 grid steps so both TensorCores get work on v7x,
    #  * size the tile so it (nearly) divides B: padded-batch waste stays < n_steps rows.
    n_steps = max(1, -(-B // max(1, int(b_tile))))
    if B >= 2:
        n_steps = max(n_steps, 2)
    bt = -(-B // n_steps)
    pad = n_steps * bt - B
    if pad:
        x = jnp.pad(x, ((0, pad), (0, 0), (0, 0)))

    def full(shape):
        return pl.BlockSpec(shape, lambda b: (0,) * len(shape))

    out = pl.pallas_call(
        w_block_kernel,
        out_shape=jax.ShapeDtypeStruct((B + pad, W, C), x.dtype),
        grid_spec=pltpu.PrefetchScalarGridSpec(
            num_scalar_prefetch=0,
            grid=(n_steps,),
            in_specs=[
                pl.BlockSpec((bt, W, C), lambda b: (b, 0, 0)),   # x (batch tile)
                full((1, C)),                                    # ln1 gamma (f32)
                full((1, C)),                                    # ln1 beta  (f32)
                full((C, 3 * C)),                                # qkv weight (bf16, in,out)
                full((C, C)),                                    # attn proj weight (bf16)
                full((1, C)),                                    # ln2 gamma (f32)
                full((1, C)),                                    # ln2 beta  (f32)
                full((C, N_HIDDEN)),                             # mlp fc weight (bf16)
                full((N_HIDDEN, C)),                             # mlp proj weight (bf16)
            ],
            out_specs=pl.BlockSpec((bt, W, C), lambda b: (b, 0, 0)),
        ),
        compiler_params=pltpu.CompilerParams(
            dimension_semantics=("parallel",),
            vmem_limit_bytes=64 * 1024 * 1024,
        ),
    )(x, kparams["ln1_g"], kparams["ln1_b"], kparams["w_attn"], kparams["w_aproj"],
      kparams["ln2_g"], kparams["ln2_b"], kparams["w_fc"], kparams["w_proj"])
    return out[:B]


def reference_forward(x, params):
    """Pure-JAX f32 reference of W_Block.forward (dropout = identity)."""
    def ln(v, g, b):
        mu = jnp.mean(v, axis=-1, keepdims=True)
        var = jnp.mean((v - mu) ** 2, axis=-1, keepdims=True)
        return (v - mu) * jax.lax.rsqrt(var + LN_EPS) * g + b

    B, W, C = x.shape
    h = ln(x, params["ln1_g"][0], params["ln1_b"][0])
    qkv = h @ params["w_attn"]
    q, k, v = jnp.split(qkv, 3, axis=-1)
    q = q.reshape(B, W, N_HEADS, HEAD_DIM).transpose(0, 2, 1, 3)
    k = k.reshape(B, W, N_HEADS, HEAD_DIM).transpose(0, 2, 1, 3)
    v = v.reshape(B, W, N_HEADS, HEAD_DIM).transpose(0, 2, 1, 3)
    scores = jnp.einsum("bhqd,bhkd->bhqk", q, k) / math.sqrt(HEAD_DIM)
    mask = jnp.tril(jnp.ones((W, W), bool))
    scores = jnp.where(mask, scores, -jnp.inf)
    p = jax.nn.softmax(scores, axis=-1)
    out = jnp.einsum("bhqk,bhkd->bhqd", p, v).transpose(0, 2, 1, 3).reshape(B, W, C)
    x1 = x + out @ params["w_aproj"]
    h2 = ln(x1, params["ln2_g"][0], params["ln2_b"][0])
    mlp = jax.nn.gelu(h2 @ params["w_fc"], approximate=False) @ params["w_proj"]
    return x1 + mlp


def init_params(key):
    ks = jax.random.split(key, 4)
    s = 0.02
    return {
        "ln1_g": jnp.ones((1, N_EMBD), jnp.float32),
        "ln1_b": jnp.zeros((1, N_EMBD), jnp.float32),
        # stored as (in, out) == transpose of torch Linear.weight (all bias=False)
        "w_attn": s * jax.random.normal(ks[0], (N_EMBD, 3 * N_EMBD), jnp.float32),
        "w_aproj": s * jax.random.normal(ks[1], (N_EMBD, N_EMBD), jnp.float32),
        "ln2_g": jnp.ones((1, N_EMBD), jnp.float32),
        "ln2_b": jnp.zeros((1, N_EMBD), jnp.float32),
        "w_fc": s * jax.random.normal(ks[2], (N_EMBD, N_HIDDEN), jnp.float32),
        "w_proj": s * jax.random.normal(ks[3], (N_HIDDEN, N_EMBD), jnp.float32),
    }


if __name__ == "__main__":
    key = jax.random.PRNGKey(0)
    kx1, kx2, kp = jax.random.split(key, 3)
    params = init_params(kp)
    kparams = prepare_kernel_params(params)   # one-time parameter transform

    # Config-sized case: batch_size=4, w_block_size=16, n_embd=32 (2 parallel grid steps).
    x_small = jax.random.normal(kx1, (4, W_BLOCK, N_EMBD), jnp.float32)
    out_small = jax.block_until_ready(w_block_forward(x_small, kparams))
    ref_small = reference_forward(x_small, params)
    assert out_small.shape == x_small.shape
    err_s = float(jnp.max(jnp.abs(out_small - ref_small)))
    assert jnp.allclose(out_small, ref_small, atol=1e-2, rtol=1e-2), (
        f"small-batch mismatch, max abs err {err_s}")

    # Larger batch: exercises tile-size selection (tile = 25, 2 steps, zero padding).
    x_big = jax.random.normal(kx2, (50, W_BLOCK, N_EMBD), jnp.float32)
    out_big = jax.block_until_ready(w_block_forward(x_big, kparams, b_tile=128))
    ref_big = reference_forward(x_big, params)
    assert out_big.shape == x_big.shape
    err_b = float(jnp.max(jnp.abs(out_big - ref_big)))
    assert jnp.allclose(out_big, ref_big, atol=1e-2, rtol=1e-2), (
        f"large-batch mismatch, max abs err {err_b}")

    print("KERNEL_OK")
</pallas_src>

<mosaic_0001>
module attributes {stable_mosaic.version = 11 : i64} {
  func.func @w_block_kernel(%arg0: i32, %arg1: memref<2x16x32xf32, #tpu.memory_space<vmem>>, %arg2: memref<1x32xf32, #tpu.memory_space<vmem>>, %arg3: memref<1x32xf32, #tpu.memory_space<vmem>>, %arg4: memref<32x96xbf16, #tpu.memory_space<vmem>>, %arg5: memref<32x32xbf16, #tpu.memory_space<vmem>>, %arg6: memref<1x32xf32, #tpu.memory_space<vmem>>, %arg7: memref<1x32xf32, #tpu.memory_space<vmem>>, %arg8: memref<32x128xbf16, #tpu.memory_space<vmem>>, %arg9: memref<128x32xbf16, #tpu.memory_space<vmem>>, %arg10: memref<2x16x32xf32, #tpu.memory_space<vmem>>) attributes {dimension_semantics = [#tpu.dimension_semantics<parallel>], iteration_bounds = array<i64: 2>, scalar_prefetch = 0 : i64, scratch_operands = 0 : i64, tpu.core_type = #tpu.core_type<tc>, window_params = [{transform_indices = @transform_0, window_bounds = array<i64: 2, 16, 32>}, {pipeline_mode = #tpu.pipeline_mode<synchronous>, transform_indices = @transform_1, window_bounds = array<i64: 1, 32>}, {pipeline_mode = #tpu.pipeline_mode<synchronous>, transform_indices = @transform_2, window_bounds = array<i64: 1, 32>}, {pipeline_mode = #tpu.pipeline_mode<synchronous>, transform_indices = @transform_3, window_bounds = array<i64: 32, 96>}, {pipeline_mode = #tpu.pipeline_mode<synchronous>, transform_indices = @transform_4, window_bounds = array<i64: 32, 32>}, {pipeline_mode = #tpu.pipeline_mode<synchronous>, transform_indices = @transform_5, window_bounds = array<i64: 1, 32>}, {pipeline_mode = #tpu.pipeline_mode<synchronous>, transform_indices = @transform_6, window_bounds = array<i64: 1, 32>}, {pipeline_mode = #tpu.pipeline_mode<synchronous>, transform_indices = @transform_7, window_bounds = array<i64: 32, 128>}, {pipeline_mode = #tpu.pipeline_mode<synchronous>, transform_indices = @transform_8, window_bounds = array<i64: 128, 32>}, {transform_indices = @transform_9, window_bounds = array<i64: 2, 16, 32>}]} {
    %c0 = arith.constant 0 : index
    %c0_0 = arith.constant 0 : index
    %c0_1 = arith.constant 0 : index
    %0 = vector.load %arg1[%c0, %c0_0, %c0_1] : memref<2x16x32xf32, #tpu.memory_space<vmem>>, vector<2x16x32xf32>
    %1 = vector.shape_cast %0 : vector<2x16x32xf32> to vector<32x32xf32>
    %c0_2 = arith.constant 0 : index
    %c0_3 = arith.constant 0 : index
    %2 = vector.load %arg2[%c0_2, %c0_3] : memref<1x32xf32, #tpu.memory_space<vmem>>, vector<1x32xf32>
    %3 = vector.shape_cast %2 : vector<1x32xf32> to vector<32xf32>
    %c0_4 = arith.constant 0 : index
    %c0_5 = arith.constant 0 : index
    %4 = vector.load %arg3[%c0_4, %c0_5] : memref<1x32xf32, #tpu.memory_space<vmem>>, vector<1x32xf32>
    %5 = vector.shape_cast %4 : vector<1x32xf32> to vector<32xf32>
    %cst = arith.constant dense<0.000000e+00> : vector<32xf32>
    %6 = vector.multi_reduction <add>, %1, %cst [1] : vector<32x32xf32> to vector<32xf32>
    %7 = vector.shape_cast %6 : vector<32xf32> to vector<32x1xf32>
    %cst_6 = arith.constant 3.200000e+01 : f32
    %8 = vector.broadcast %cst_6 : f32 to vector<32x1xf32>
    %9 = arith.divf %7, %8 : vector<32x1xf32>
    %10 = vector.broadcast %9 : vector<32x1xf32> to vector<32x32xf32>
    %11 = arith.subf %1, %10 : vector<32x32xf32>
    %12 = arith.mulf %11, %11 : vector<32x32xf32>
    %cst_7 = arith.constant dense<0.000000e+00> : vector<32xf32>
    %13 = vector.multi_reduction <add>, %12, %cst_7 [1] : vector<32x32xf32> to vector<32xf32>
    %14 = vector.shape_cast %13 : vector<32xf32> to vector<32x1xf32>
    %cst_8 = arith.constant 3.200000e+01 : f32
    %15 = vector.broadcast %cst_8 : f32 to vector<32x1xf32>
    %16 = arith.divf %14, %15 : vector<32x1xf32>
    %17 = vector.broadcast %9 : vector<32x1xf32> to vector<32x32xf32>
    %18 = arith.subf %1, %17 : vector<32x32xf32>
    %cst_9 = arith.constant 9.99999974E-6 : f32
    %19 = vector.broadcast %cst_9 : f32 to vector<32x1xf32>
    %20 = arith.addf %16, %19 : vector<32x1xf32>
    %21 = math.rsqrt %20 : vector<32x1xf32>
    %22 = vector.broadcast %21 : vector<32x1xf32> to vector<32x32xf32>
    %23 = arith.mulf %18, %22 : vector<32x32xf32>
    %24 = vector.shape_cast %3 : vector<32xf32> to vector<1x32xf32>
    %25 = vector.broadcast %24 : vector<1x32xf32> to vector<32x32xf32>
    %26 = arith.mulf %23, %25 : vector<32x32xf32>
    %27 = vector.shape_cast %5 : vector<32xf32> to vector<1x32xf32>
    %28 = vector.broadcast %27 : vector<1x32xf32> to vector<32x32xf32>
    %29 = arith.addf %26, %28 : vector<32x32xf32>
    %30 = arith.truncf %29 : vector<32x32xf32> to vector<32x32xbf16>
    %c0_10 = arith.constant 0 : index
    %c0_11 = arith.constant 0 : index
    %31 = vector.load %arg4[%c0_10, %c0_11] : memref<32x96xbf16, #tpu.memory_space<vmem>>, vector<32x96xbf16>
    %cst_12 = arith.constant dense<0.000000e+00> : vector<32x96xf32>
    %32 = tpu.matmul %30, %31, %cst_12 {dimension_numbers = #tpu.dot_dimension_numbers<[1], [0], [0], [1], [0, 0, 1, 1], [], []>} : vector<32x32xbf16>, vector<32x96xbf16>, vector<32x96xf32> -> vector<32x96xf32>
    %33 = vector.extract_strided_slice %32 {offsets = [0, 0], sizes = [32, 32], strides = [1, 1]} : vector<32x96xf32> to vector<32x32xf32>
    %34 = arith.truncf %33 : vector<32x32xf32> to vector<32x32xbf16>
    %35 = vector.shape_cast %34 : vector<32x32xbf16> to vector<2x16x32xbf16>
    %36 = vector.extract_strided_slice %32 {offsets = [0, 32], sizes = [32, 32], strides = [1, 1]} : vector<32x96xf32> to vector<32x32xf32>
    %37 = arith.truncf %36 : vector<32x32xf32> to vector<32x32xbf16>
    %38 = vector.shape_cast %37 : vector<32x32xbf16> to vector<2x16x32xbf16>
    %39 = vector.extract_strided_slice %32 {offsets = [0, 64], sizes = [32, 32], strides = [1, 1]} : vector<32x96xf32> to vector<32x32xf32>
    %40 = arith.truncf %39 : vector<32x32xf32> to vector<32x32xbf16>
    %41 = vector.shape_cast %40 : vector<32x32xbf16> to vector<2x16x32xbf16>
    %42 = tpu.iota {dimensions = array<i32: 0>} : vector<16x16xi32>
    %43 = tpu.iota {dimensions = array<i32: 1>} : vector<16x16xi32>
    %44 = arith.cmpi sle, %43, %42 : vector<16x16xi32>
    %cst_13 = arith.constant 0.000000e+00 : f32
    %cst_14 = arith.constant 0xFF800000 : f32
    %45 = vector.broadcast %cst_13 : f32 to vector<16x16xf32>
    %46 = vector.broadcast %cst_14 : f32 to vector<16x16xf32>
    %47 = arith.select %44, %45, %46 : vector<16x16xi1>, vector<16x16xf32>
    %48 = tpu.iota {dimensions = array<i32: 2>} : vector<1x1x32xi32>
    %cst_15 = arith.constant 0.000000e+00 : f32
    %49 = vector.broadcast %cst_15 : f32 to vector<2x16x32xf32>
    %c0_i32 = arith.constant 0 : i32
    %50 = vector.broadcast %c0_i32 : i32 to vector<1x1x32xi32>
    %51 = arith.cmpi sge, %48, %50 : vector<1x1x32xi32>
    %c16_i32 = arith.constant 16 : i32
    %52 = vector.broadcast %c16_i32 : i32 to vector<1x1x32xi32>
    %53 = arith.cmpi slt, %48, %52 : vector<1x1x32xi32>
    %54 = arith.andi %51, %53 : vector<1x1x32xi1>
    %cst_16 = arith.constant 0.000000e+00 : bf16
    %55 = vector.broadcast %cst_16 : bf16 to vector<2x16x32xbf16>
    %56 = vector.shape_cast %54 : vector<1x1x32xi1> to vector<1x1x32xi1>
    %57 = vector.broadcast %56 : vector<1x1x32xi1> to vector<2x16x32xi1>
    %58 = arith.select %57, %35, %55 : vector<2x16x32xi1>, vector<2x16x32xbf16>
    %cst_17 = arith.constant 0.000000e+00 : bf16
    %59 = vector.broadcast %cst_17 : bf16 to vector<2x16x32xbf16>
    %60 = vector.shape_cast %54 : vector<1x1x32xi1> to vector<1x1x32xi1>
    %61 = vector.broadcast %60 : vector<1x1x32xi1> to vector<2x16x32xi1>
    %62 = arith.select %61, %41, %59 : vector<2x16x32xi1>, vector<2x16x32xbf16>
    "tpu.trace_start"() <{level = 10 : i32, message = "bqc,bkc->bqk"}> : () -> ()
    %cst_18 = arith.constant dense<0.000000e+00> : vector<2x16x16xf32>
    %63 = tpu.matmul %58, %38, %cst_18 {dimension_numbers = #tpu.dot_dimension_numbers<[2], [2], [1], [1], [0, 0, 0, 1, 1, 1], [0], [0]>} : vector<2x16x32xbf16>, vector<2x16x32xbf16>, vector<2x16x16xf32> -> vector<2x16x16xf32>
    "tpu.trace_stop"() : () -> ()
    %64 = vector.shape_cast %47 : vector<16x16xf32> to vector<1x16x16xf32>
    %65 = vector.broadcast %64 : vector<1x16x16xf32> to vector<2x16x16xf32>
    %66 = arith.addf %63, %65 : vector<2x16x16xf32>
    %cst_19 = arith.constant dense<0xFF800000> : vector<2x16xf32>
    %67 = vector.multi_reduction <maximumf>, %66, %cst_19 [2] : vector<2x16x16xf32> to vector<2x16xf32>
    %68 = vector.shape_cast %67 : vector<2x16xf32> to vector<2x16x1xf32>
    %69 = vector.broadcast %68 : vector<2x16x1xf32> to vector<2x16x16xf32>
    %70 = arith.subf %66, %69 : vector<2x16x16xf32>
    %71 = math.exp %70 : vector<2x16x16xf32>
    %cst_20 = arith.constant dense<0.000000e+00> : vector<2x16xf32>
    %72 = vector.multi_reduction <add>, %71, %cst_20 [2] : vector<2x16x16xf32> to vector<2x16xf32>
    %73 = vector.shape_cast %72 : vector<2x16xf32> to vector<2x16x1xf32>
    %74 = tpu.reciprocal %73 {approx = true} : vector<2x16x1xf32> -> vector<2x16x1xf32>
    %75 = vector.broadcast %74 : vector<2x16x1xf32> to vector<2x16x16xf32>
    %76 = arith.mulf %71, %75 : vector<2x16x16xf32>
    %77 = arith.truncf %76 : vector<2x16x16xf32> to vector<2x16x16xbf16>
    "tpu.trace_start"() <{level = 10 : i32, message = "bqk,bkc->bqc"}> : () -> ()
    %cst_21 = arith.constant dense<0.000000e+00> : vector<2x16x32xf32>
    %78 = tpu.matmul %77, %62, %cst_21 {dimension_numbers = #tpu.dot_dimension_numbers<[2], [1], [1], [2], [0, 0, 0, 1, 1, 2], [0], [0]>} : vector<2x16x16xbf16>, vector<2x16x32xbf16>, vector<2x16x32xf32> -> vector<2x16x32xf32>
    "tpu.trace_stop"() : () -> ()
    %79 = arith.addf %49, %78 : vector<2x16x32xf32>
    %c16_i32_22 = arith.constant 16 : i32
    %80 = vector.broadcast %c16_i32_22 : i32 to vector<1x1x32xi32>
    %81 = arith.cmpi sge, %48, %80 : vector<1x1x32xi32>
    %c32_i32 = arith.constant 32 : i32
    %82 = vector.broadcast %c32_i32 : i32 to vector<1x1x32xi32>
    %83 = arith.cmpi slt, %48, %82 : vector<1x1x32xi32>
    %84 = arith.andi %81, %83 : vector<1x1x32xi1>
    %cst_23 = arith.constant 0.000000e+00 : bf16
    %85 = vector.broadcast %cst_23 : bf16 to vector<2x16x32xbf16>
    %86 = vector.shape_cast %84 : vector<1x1x32xi1> to vector<1x1x32xi1>
    %87 = vector.broadcast %86 : vector<1x1x32xi1> to vector<2x16x32xi1>
    %88 = arith.select %87, %35, %85 : vector<2x16x32xi1>, vector<2x16x32xbf16>
    %cst_24 = arith.constant 0.000000e+00 : bf16
    %89 = vector.broadcast %cst_24 : bf16 to vector<2x16x32xbf16>
    %90 = vector.shape_cast %84 : vector<1x1x32xi1> to vector<1x1x32xi1>
    %91 = vector.broadcast %90 : vector<1x1x32xi1> to vector<2x16x32xi1>
    %92 = arith.select %91, %41, %89 : vector<2x16x32xi1>, vector<2x16x32xbf16>
    "tpu.trace_start"() <{level = 10 : i32, message = "bqc,bkc->bqk"}> : () -> ()
    %cst_25 = arith.constant dense<0.000000e+00> : vector<2x16x16xf32>
    %93 = tpu.matmul %88, %38, %cst_25 {dimension_numbers = #tpu.dot_dimension_numbers<[2], [2], [1], [1], [0, 0, 0, 1, 1, 1], [0], [0]>} : vector<2x16x32xbf16>, vector<2x16x32xbf16>, vector<2x16x16xf32> -> vector<2x16x16xf32>
    "tpu.trace_stop"() : () -> ()
    %94 = vector.shape_cast %47 : vector<16x16xf32> to vector<1x16x16xf32>
    %95 = vector.broadcast %94 : vector<1x16x16xf32> to vector<2x16x16xf32>
    %96 = arith.addf %93, %95 : vector<2x16x16xf32>
    %cst_26 = arith.constant dense<0xFF800000> : vector<2x16xf32>
    %97 = vector.multi_reduction <maximumf>, %96, %cst_26 [2] : vector<2x16x16xf32> to vector<2x16xf32>
    %98 = vector.shape_cast %97 : vector<2x16xf32> to vector<2x16x1xf32>
    %99 = vector.broadcast %98 : vector<2x16x1xf32> to vector<2x16x16xf32>
    %100 = arith.subf %96, %99 : vector<2x16x16xf32>
    %101 = math.exp %100 : vector<2x16x16xf32>
    %cst_27 = arith.constant dense<0.000000e+00> : vector<2x16xf32>
    %102 = vector.multi_reduction <add>, %101, %cst_27 [2] : vector<2x16x16xf32> to vector<2x16xf32>
    %103 = vector.shape_cast %102 : vector<2x16xf32> to vector<2x16x1xf32>
    %104 = tpu.reciprocal %103 {approx = true} : vector<2x16x1xf32> -> vector<2x16x1xf32>
    %105 = vector.broadcast %104 : vector<2x16x1xf32> to vector<2x16x16xf32>
    %106 = arith.mulf %101, %105 : vector<2x16x16xf32>
    %107 = arith.truncf %106 : vector<2x16x16xf32> to vector<2x16x16xbf16>
    "tpu.trace_start"() <{level = 10 : i32, message = "bqk,bkc->bqc"}> : () -> ()
    %cst_28 = arith.constant dense<0.000000e+00> : vector<2x16x32xf32>
    %108 = tpu.matmul %107, %92, %cst_28 {dimension_numbers = #tpu.dot_dimension_numbers<[2], [1], [1], [2], [0, 0, 0, 1, 1, 2], [0], [0]>} : vector<2x16x16xbf16>, vector<2x16x32xbf16>, vector<2x16x32xf32> -> vector<2x16x32xf32>
    "tpu.trace_stop"() : () -> ()
    %109 = arith.addf %79, %108 : vector<2x16x32xf32>
    %110 = vector.shape_cast %109 : vector<2x16x32xf32> to vector<32x32xf32>
    %111 = arith.truncf %110 : vector<32x32xf32> to vector<32x32xbf16>
    %c0_29 = arith.constant 0 : index
    %c0_30 = arith.constant 0 : index
    %112 = vector.load %arg5[%c0_29, %c0_30] : memref<32x32xbf16, #tpu.memory_space<vmem>>, vector<32x32xbf16>
    %cst_31 = arith.constant dense<0.000000e+00> : vector<32x32xf32>
    %113 = tpu.matmul %111, %112, %cst_31 {dimension_numbers = #tpu.dot_dimension_numbers<[1], [0], [0], [1], [0, 0, 1, 1], [], []>} : vector<32x32xbf16>, vector<32x32xbf16>, vector<32x32xf32> -> vector<32x32xf32>
    %114 = arith.addf %1, %113 : vector<32x32xf32>
    %c0_32 = arith.constant 0 : index
    %c0_33 = arith.constant 0 : index
    %115 = vector.load %arg6[%c0_32, %c0_33] : memref<1x32xf32, #tpu.memory_space<vmem>>, vector<1x32xf32>
    %116 = vector.shape_cast %115 : vector<1x32xf32> to vector<32xf32>
    %c0_34 = arith.constant 0 : index
    %c0_35 = arith.constant 0 : index
    %117 = vector.load %arg7[%c0_34, %c0_35] : memref<1x32xf32, #tpu.memory_space<vmem>>, vector<1x32xf32>
    %118 = vector.shape_cast %117 : vector<1x32xf32> to vector<32xf32>
    %cst_36 = arith.constant dense<0.000000e+00> : vector<32xf32>
    %119 = vector.multi_reduction <add>, %114, %cst_36 [1] : vector<32x32xf32> to vector<32xf32>
    %120 = vector.shape_cast %119 : vector<32xf32> to vector<32x1xf32>
    %cst_37 = arith.constant 3.200000e+01 : f32
    %121 = vector.broadcast %cst_37 : f32 to vector<32x1xf32>
    %122 = arith.divf %120, %121 : vector<32x1xf32>
    %123 = vector.broadcast %122 : vector<32x1xf32> to vector<32x32xf32>
    %124 = arith.subf %114, %123 : vector<32x32xf32>
    %125 = arith.mulf %124, %124 : vector<32x32xf32>
    %cst_38 = arith.constant dense<0.000000e+00> : vector<32xf32>
    %126 = vector.multi_reduction <add>, %125, %cst_38 [1] : vector<32x32xf32> to vector<32xf32>
    %127 = vector.shape_cast %126 : vector<32xf32> to vector<32x1xf32>
    %cst_39 = arith.constant 3.200000e+01 : f32
    %128 = vector.broadcast %cst_39 : f32 to vector<32x1xf32>
    %129 = arith.divf %127, %128 : vector<32x1xf32>
    %130 = vector.broadcast %122 : vector<32x1xf32> to vector<32x32xf32>
    %131 = arith.subf %114, %130 : vector<32x32xf32>
    %cst_40 = arith.constant 9.99999974E-6 : f32
    %132 = vector.broadcast %cst_40 : f32 to vector<32x1xf32>
    %133 = arith.addf %129, %132 : vector<32x1xf32>
    %134 = math.rsqrt %133 : vector<32x1xf32>
    %135 = vector.broadcast %134 : vector<32x1xf32> to vector<32x32xf32>
    %136 = arith.mulf %131, %135 : vector<32x32xf32>
    %137 = vector.shape_cast %116 : vector<32xf32> to vector<1x32xf32>
    %138 = vector.broadcast %137 : vector<1x32xf32> to vector<32x32xf32>
    %139 = arith.mulf %136, %138 : vector<32x32xf32>
    %140 = vector.shape_cast %118 : vector<32xf32> to vector<1x32xf32>
    %141 = vector.broadcast %140 : vector<1x32xf32> to vector<32x32xf32>
    %142 = arith.addf %139, %141 : vector<32x32xf32>
    %143 = arith.truncf %142 : vector<32x32xf32> to vector<32x32xbf16>
    %c0_41 = arith.constant 0 : index
    %c0_42 = arith.constant 0 : index
    %144 = vector.load %arg8[%c0_41, %c0_42] : memref<32x128xbf16, #tpu.memory_space<vmem>>, vector<32x128xbf16>
    %cst_43 = arith.constant dense<0.000000e+00> : vector<32x128xf32>
    %145 = tpu.matmul %143, %144, %cst_43 {dimension_numbers = #tpu.dot_dimension_numbers<[1], [0], [0], [1], [0, 0, 1, 1], [], []>} : vector<32x32xbf16>, vector<32x128xbf16>, vector<32x128xf32> -> vector<32x128xf32>
    %cst_44 = arith.constant 0.707106769 : f32
    %146 = vector.broadcast %cst_44 : f32 to vector<32x128xf32>
    %147 = arith.mulf %145, %146 : vector<32x128xf32>
    %148 = math.absf %147 : vector<32x128xf32>
    %cst_45 = arith.constant 0.327591091 : f32
    %149 = vector.broadcast %cst_45 : f32 to vector<32x128xf32>
    %150 = arith.mulf %149, %148 : vector<32x128xf32>
    %cst_46 = arith.constant 1.000000e+00 : f32
    %151 = vector.broadcast %cst_46 : f32 to vector<32x128xf32>
    %152 = arith.addf %151, %150 : vector<32x128xf32>
    %cst_47 = arith.constant 1.000000e+00 : f32
    %153 = vector.broadcast %cst_47 : f32 to vector<32x128xf32>
    %154 = arith.divf %153, %152 : vector<32x128xf32>
    %cst_48 = arith.constant 1.06140542 : f32
    %155 = vector.broadcast %cst_48 : f32 to vector<32x128xf32>
    %156 = arith.mulf %154, %155 : vector<32x128xf32>
    %cst_49 = arith.constant -1.45315206 : f32
    %157 = vector.broadcast %cst_49 : f32 to vector<32x128xf32>
    %158 = arith.addf %157, %156 : vector<32x128xf32>
    %159 = arith.mulf %154, %158 : vector<32x128xf32>
    %cst_50 = arith.constant 1.42141378 : f32
    %160 = vector.broadcast %cst_50 : f32 to vector<32x128xf32>
    %161 = arith.addf %160, %159 : vector<32x128xf32>
    %162 = arith.mulf %154, %161 : vector<32x128xf32>
    %cst_51 = arith.constant -0.284496725 : f32
    %163 = vector.broadcast %cst_51 : f32 to vector<32x128xf32>
    %164 = arith.addf %163, %162 : vector<32x128xf32>
    %165 = arith.mulf %154, %164 : vector<32x128xf32>
    %cst_52 = arith.constant 0.254829586 : f32
    %166 = vector.broadcast %cst_52 : f32 to vector<32x128xf32>
    %167 = arith.addf %166, %165 : vector<32x128xf32>
    %168 = arith.mulf %154, %167 : vector<32x128xf32>
    %cst_53 = arith.constant 0.000000e+00 : f32
    %169 = vector.broadcast %cst_53 : f32 to vector<32x128xf32>
    %170 = arith.subf %169, %148 : vector<32x128xf32>
    %171 = arith.mulf %170, %148 : vector<32x128xf32>
    %172 = math.exp %171 : vector<32x128xf32>
    %173 = arith.mulf %168, %172 : vector<32x128xf32>
    %cst_54 = arith.constant 1.000000e+00 : f32
    %174 = vector.broadcast %cst_54 : f32 to vector<32x128xf32>
    %175 = arith.subf %174, %173 : vector<32x128xf32>
    %cst_55 = arith.constant 0.000000e+00 : f32
    %176 = vector.broadcast %cst_55 : f32 to vector<32x128xf32>
    %177 = arith.cmpf oge, %147, %176 : vector<32x128xf32>
    %cst_56 = arith.constant 0.000000e+00 : f32
    %178 = vector.broadcast %cst_56 : f32 to vector<32x128xf32>
    %179 = arith.subf %178, %175 : vector<32x128xf32>
    %180 = arith.select %177, %175, %179 : vector<32x128xi1>, vector<32x128xf32>
    %cst_57 = arith.constant 5.000000e-01 : f32
    %181 = vector.broadcast %cst_57 : f32 to vector<32x128xf32>
    %182 = arith.mulf %181, %145 : vector<32x128xf32>
    %cst_58 = arith.constant 1.000000e+00 : f32
    %183 = vector.broadcast %cst_58 : f32 to vector<32x128xf32>
    %184 = arith.addf %183, %180 : vector<32x128xf32>
    %185 = arith.mulf %182, %184 : vector<32x128xf32>
    %186 = arith.truncf %185 : vector<32x128xf32> to vector<32x128xbf16>
    %c0_59 = arith.constant 0 : index
    %c0_60 = arith.constant 0 : index
    %187 = vector.load %arg9[%c0_59, %c0_60] : memref<128x32xbf16, #tpu.memory_space<vmem>>, vector<128x32xbf16>
    %cst_61 = arith.constant dense<0.000000e+00> : vector<32x32xf32>
    %188 = tpu.matmul %186, %187, %cst_61 {dimension_numbers = #tpu.dot_dimension_numbers<[1], [0], [0], [1], [0, 0, 1, 1], [], []>} : vector<32x128xbf16>, vector<128x32xbf16>, vector<32x32xf32> -> vector<32x32xf32>
    %189 = arith.addf %114, %188 : vector<32x32xf32>
    %190 = vector.shape_cast %189 : vector<32x32xf32> to vector<2x16x32xf32>
    %c0_62 = arith.constant 0 : index
    %c0_63 = arith.constant 0 : index
    %c0_64 = arith.constant 0 : index
    %191 = vector.load %arg10[%c0_62, %c0_63, %c0_64] : memref<2x16x32xf32, #tpu.memory_space<vmem>>, vector<2x16x32xf32>
    tpu.vector_store %arg10[%c0_62, %c0_63, %c0_64], %190 {strides = array<i32>} : memref<2x16x32xf32, #tpu.memory_space<vmem>>, vector<2x16x32xf32>,
    return
  }
  func.func @transform_0(%arg0: i32) -> (i32, i32, i32) {
    %c0_i32 = arith.constant 0 : i32
    %c0_i32_0 = arith.constant 0 : i32
    %c0_i32_1 = arith.constant 0 : i32
    return %arg0, %c0_i32, %c0_i32_0 : i32, i32, i32
  }
  func.func @transform_1(%arg0: i32) -> (i32, i32) {
    %c0_i32 = arith.constant 0 : i32
    %c0_i32_0 = arith.constant 0 : i32
    %c0_i32_1 = arith.constant 0 : i32
    return %c0_i32, %c0_i32_0 : i32, i32
  }
  func.func @transform_2(%arg0: i32) -> (i32, i32) {
    %c0_i32 = arith.constant 0 : i32
    %c0_i32_0 = arith.constant 0 : i32
    %c0_i32_1 = arith.constant 0 : i32
    return %c0_i32, %c0_i32_0 : i32, i32
  }
  func.func @transform_3(%arg0: i32) -> (i32, i32) {
    %c0_i32 = arith.constant 0 : i32
    %c0_i32_0 = arith.constant 0 : i32
    %c0_i32_1 = arith.constant 0 : i32
    return %c0_i32, %c0_i32_0 : i32, i32
  }
  func.func @transform_4(%arg0: i32) -> (i32, i32) {
    %c0_i32 = arith.constant 0 : i32
    %c0_i32_0 = arith.constant 0 : i32
    %c0_i32_1 = arith.constant 0 : i32
    return %c0_i32, %c0_i32_0 : i32, i32
  }
  func.func @transform_5(%arg0: i32) -> (i32, i32) {
    %c0_i32 = arith.constant 0 : i32
    %c0_i32_0 = arith.constant 0 : i32
    %c0_i32_1 = arith.constant 0 : i32
    return %c0_i32, %c0_i32_0 : i32, i32
  }
  func.func @transform_6(%arg0: i32) -> (i32, i32) {
    %c0_i32 = arith.constant 0 : i32
    %c0_i32_0 = arith.constant 0 : i32
    %c0_i32_1 = arith.constant 0 : i32
    return %c0_i32, %c0_i32_0 : i32, i32
  }
  func.func @transform_7(%arg0: i32) -> (i32, i32) {
    %c0_i32 = arith.constant 0 : i32
    %c0_i32_0 = arith.constant 0 : i32
    %c0_i32_1 = arith.constant 0 : i32
    return %c0_i32, %c0_i32_0 : i32, i32
  }
  func.func @transform_8(%arg0: i32) -> (i32, i32) {
    %c0_i32 = arith.constant 0 : i32
    %c0_i32_0 = arith.constant 0 : i32
    %c0_i32_1 = arith.constant 0 : i32
    return %c0_i32, %c0_i32_0 : i32, i32
  }
  func.func @transform_9(%arg0: i32) -> (i32, i32, i32) {
    %c0_i32 = arith.constant 0 : i32
    %c0_i32_0 = arith.constant 0 : i32
    %c0_i32_1 = arith.constant 0 : i32
    return %arg0, %c0_i32, %c0_i32_0 : i32, i32, i32
  }
}

</mosaic_0001>

<llo_original>
// kernel: tpu_custom_call.1
$region0: #{tpu_custom_call.1}
  #allocation0 [shape = 'u32[]', space=smem, size = 0x4, offset = 0x4, fixed_abs, tag = 'smem constant byte address 0x4 - core index']
  #allocation1 [shape = 'u32[144,128]{1,0:T(1,128)}', space=vmem, size = 0x12000, scoped, tag = 'internal scratch']
  %s0 = inlined_call_operand.vmem [shape: f32[4,16,32], index: 0, kind: input, shape index: {}]
  %s1 = inlined_call_operand.vmem [shape: f32[1,32], index: 1, kind: input, shape index: {}]
  %s2 = inlined_call_operand.vmem [shape: f32[1,32], index: 2, kind: input, shape index: {}]
  %s3 = inlined_call_operand.vmem [shape: bf16[32,96], index: 3, kind: input, shape index: {}]
  %s4 = inlined_call_operand.hbm [shape: bf16[32,32], index: 4, kind: input, shape index: {}]
  %s5 = inlined_call_operand.vmem [shape: f32[1,32], index: 5, kind: input, shape index: {}]
  %s6 = inlined_call_operand.vmem [shape: f32[1,32], index: 6, kind: input, shape index: {}]
  %s7 = inlined_call_operand.hbm [shape: bf16[32,128], index: 7, kind: input, shape index: {}]
  %s8 = inlined_call_operand.vmem [shape: bf16[128,32], index: 8, kind: input, shape index: {}]
  %s9 = inlined_call_operand.hbm [shape: f32[4,16,32], index: 9, kind: output, shape index: {}]
  %s10 = sld [smem:[#allocation0]]
  $region77: #{tpu_custom_call.1} parent=0
    _
  %s12 = ssub.s32 1, %s10
  %s13 = scalar_select 0, %s12, %s10
  $region1: #{tpu_custom_call.1} parent=0
    #allocation2 [shape = 'u8[8192]{0}', space=vmem, size = 0x2000, scoped, tag = 'input window, operand 4, single buffered']
    #allocation3 [shape = 's32[2]{0}', space=sflag, size = 0x8, scoped, tag = 'scoped memory for tpu_custom_call.1']
    #allocation4 [shape = 's32[2]{0}', space=sflag, size = 0x8, scoped, tag = 'scoped memory for tpu_custom_call.1']
    #allocation5 [shape = 'u8[8192]{0}', space=vmem, size = 0x2000, scoped, tag = 'input window, operand 7, single buffered']
    #allocation6 [shape = 's32[1]{0}', space=sflag, size = 0x4, scoped, tag = 'scoped memory for tpu_custom_call.1']
    #allocation7 [shape = 'u8[32768]{0}', space=vmem, size = 0x8000, scoped, tag = 'output window, operand 0']
    %14 = vsyncpa [#allocation3], 0
    %15 = vsyncpa [#allocation6], 0
    %16 = vsyncpa [#allocation4], 0
    %s17 = scalar_lea.sflag [#allocation4], 1
    %18 = vsyncpa %s17, 0
    loop: start=0, step=1, limit=4
    $region2: #{tpu_custom_call.1} parent=1 // loop_pre_header
      _
    $region3: #{tpu_custom_call.1} parent=1 // loop_header
      %s20 = sphi 0, %s24
      %p21 = scmp.ge.s32.totalorder %s20, 4
      %s30 = sphi 0, %s32
      %s33 = sphi 0, %s30
      %s34 = sphi 0, %s33
      %s50 = sphi 0, %s34
      %s54 = sphi 0, %s54
      %s56 = sphi 0, %s54
      %s57 = sphi 0, %s56
      %s71 = sphi 0, %s57
      %s75 = sphi 0, %s75
      %s77 = sphi 0, %s75
      %s78 = sphi 0, %s77
      %s92 = sphi 0, %s78
      %s96 = sphi 0, %s96
      %s98 = sphi 0, %s96
      %s99 = sphi 0, %s98
      %s113 = sphi 0, %s99
      %s117 = sphi 0, %s117
      %s119 = sphi 0, %s117
      %s120 = sphi 0, %s119
      %s134 = sphi 0, %s120
      %s138 = sphi 0, %s138
      %s140 = sphi 0, %s138
      %s141 = sphi 0, %s140
      %s155 = sphi 0, %s141
      %s159 = sphi 0, %s159
      %s161 = sphi 0, %s159
      %s162 = sphi 0, %s161
      %s176 = sphi 0, %s162
      %s180 = sphi 0, %s180
      %s182 = sphi 0, %s180
      %s183 = sphi 0, %s182
      %s197 = sphi 0, %s183
      %s201 = sphi 0, %s201
      %s203 = sphi 0, %s201
      %s204 = sphi 0, %s203
      %s218 = sphi 0, %s204
      %s224 = sphi 0, %s226
      %s227 = sphi 0, %s224
      %s228 = sphi 0, %s227
      %s244 = sphi 0, %s228
    $region4: #{tpu_custom_call.1} parent=1 // loop_header_branch
      %23 = sbr.rel (%p21) target = $region8
    $region5: #{tpu_custom_call.1} parent=1 // loop_body
      %s25 = ssub.s32 %s20, 1
      %s26 = ssub.s32 %s20, 2
      %s27 = sadd.s32 %s20, 1
      %s28 = ssub.s32 %s20, %s27
      %p29 = scmp.eq.s32.totalorder %s28, 0
      %s31 = sadd.s32 %s30, 1
      %s32 = scalar_select %p29, %s30, %s31
      %p35 = pneg %p29
      %p36 = scmp.eq.s32.totalorder %s20, 1
      %p37 = por %p35, %p36
      %p38 = scmp.ne.s32.totalorder %s30, %s33
      %p39 = scmp.eq.s32.totalorder %s20, 0
      %p40 = por %p38, %p39
      %p41 = scmp.ne.s32.totalorder %s30, %s33
      %p42 = scmp.eq.s32.totalorder %s25, 1
      %p43 = por %p41, %p42
      %p44 = scmp.ne.s32.totalorder %s33, %s34
      %p45 = scmp.eq.s32.totalorder %s25, 0
      %p46 = por %p44, %p45
      %p47 = scmp.ne.s32.totalorder %s33, %s34
      %p48 = scmp.eq.s32.totalorder %s26, 1
      %p49 = por %p47, %p48
      %p51 = scmp.ne.s32.totalorder %s34, %s50
      %p52 = scmp.eq.s32.totalorder %s26, 0
      %p53 = por %p51, %p52
      %s55 = sadd.s32 %s54, 1
      %p58 = scmp.eq.s32.totalorder %s20, 1
      %p59 = scmp.ne.s32.totalorder %s54, %s56
      %p60 = scmp.eq.s32.totalorder %s20, 0
      %p61 = por %p59, %p60
      %p62 = scmp.ne.s32.totalorder %s54, %s56
      %p63 = scmp.eq.s32.totalorder %s25, 1
      %p64 = por %p62, %p63
      %p65 = scmp.ne.s32.totalorder %s56, %s57
      %p66 = scmp.eq.s32.totalorder %s25, 0
      %p67 = por %p65, %p66
      %p68 = scmp.ne.s32.totalorder %s56, %s57
      %p69 = scmp.eq.s32.totalorder %s26, 1
      %p70 = por %p68, %p69
      %p72 = scmp.ne.s32.totalorder %s57, %s71
      %p73 = scmp.eq.s32.totalorder %s26, 0
      %p74 = por %p72, %p73
      %s76 = sadd.s32 %s75, 1
      %p79 = scmp.eq.s32.totalorder %s20, 1
      %p80 = scmp.ne.s32.totalorder %s75, %s77
      %p81 = scmp.eq.s32.totalorder %s20, 0
      %p82 = por %p80, %p81
      %p83 = scmp.ne.s32.totalorder %s75, %s77
      %p84 = scmp.eq.s32.totalorder %s25, 1
      %p85 = por %p83, %p84
      %p86 = scmp.ne.s32.totalorder %s77, %s78
      %p87 = scmp.eq.s32.totalorder %s25, 0
      %p88 = por %p86, %p87
      %p89 = scmp.ne.s32.totalorder %s77, %s78
      %p90 = scmp.eq.s32.totalorder %s26, 1
      %p91 = por %p89, %p90
      %p93 = scmp.ne.s32.totalorder %s78, %s92
      %p94 = scmp.eq.s32.totalorder %s26, 0
      %p95 = por %p93, %p94
      %s97 = sadd.s32 %s96, 1
      %p100 = scmp.eq.s32.totalorder %s20, 1
      %p101 = scmp.ne.s32.totalorder %s96, %s98
      %p102 = scmp.eq.s32.totalorder %s20, 0
      %p103 = por %p101, %p102
      %p104 = scmp.ne.s32.totalorder %s96, %s98
      %p105 = scmp.eq.s32.totalorder %s25, 1
      %p106 = por %p104, %p105
      %p107 = scmp.ne.s32.totalorder %s98, %s99
      %p108 = scmp.eq.s32.totalorder %s25, 0
      %p109 = por %p107, %p108
      %p110 = scmp.ne.s32.totalorder %s98, %s99
      %p111 = scmp.eq.s32.totalorder %s26, 1
      %p112 = por %p110, %p111
      %p114 = scmp.ne.s32.totalorder %s99, %s113
      %p115 = scmp.eq.s32.totalorder %s26, 0
      %p116 = por %p114, %p115
      %s118 = sadd.s32 %s117, 1
      %p121 = scmp.eq.s32.totalorder %s20, 1
      %p122 = scmp.ne.s32.totalorder %s117, %s119
      %p123 = scmp.eq.s32.totalorder %s20, 0
      %p124 = por %p122, %p123
      %p125 = scmp.ne.s32.totalorder %s117, %s119
      %p126 = scmp.eq.s32.totalorder %s25, 1
      %p127 = por %p125, %p126
      %p128 = scmp.ne.s32.totalorder %s119, %s120
      %p129 = scmp.eq.s32.totalorder %s25, 0
      %p130 = por %p128, %p129
      %p131 = scmp.ne.s32.totalorder %s119, %s120
      %p132 = scmp.eq.s32.totalorder %s26, 1
      %p133 = por %p131, %p132
      %p135 = scmp.ne.s32.totalorder %s120, %s134
      %p136 = scmp.eq.s32.totalorder %s26, 0
      %p137 = por %p135, %p136
      %s139 = sadd.s32 %s138, 1
      %p142 = scmp.eq.s32.totalorder %s20, 1
      %p143 = scmp.ne.s32.totalorder %s138, %s140
      %p144 = scmp.eq.s32.totalorder %s20, 0
      %p145 = por %p143, %p144
      %p146 = scmp.ne.s32.totalorder %s138, %s140
      %p147 = scmp.eq.s32.totalorder %s25, 1
      %p148 = por %p146, %p147
      %p149 = scmp.ne.s32.totalorder %s140, %s141
      %p150 = scmp.eq.s32.totalorder %s25, 0
      %p151 = por %p149, %p150
      %p152 = scmp.ne.s32.totalorder %s140, %s141
      %p153 = scmp.eq.s32.totalorder %s26, 1
      %p154 = por %p152, %p153
      %p156 = scmp.ne.s32.totalorder %s141, %s155
      %p157 = scmp.eq.s32.totalorder %s26, 0
      %p158 = por %p156, %p157
      %s160 = sadd.s32 %s159, 1
      %p163 = scmp.eq.s32.totalorder %s20, 1
      %p164 = scmp.ne.s32.totalorder %s159, %s161
      %p165 = scmp.eq.s32.totalorder %s20, 0
      %p166 = por %p164, %p165
      %p167 = scmp.ne.s32.totalorder %s159, %s161
      %p168 = scmp.eq.s32.totalorder %s25, 1
      %p169 = por %p167, %p168
      %p170 = scmp.ne.s32.totalorder %s161, %s162
      %p171 = scmp.eq.s32.totalorder %s25, 0
      %p172 = por %p170, %p171
      %p173 = scmp.ne.s32.totalorder %s161, %s162
      %p174 = scmp.eq.s32.totalorder %s26, 1
      %p175 = por %p173, %p174
      %p177 = scmp.ne.s32.totalorder %s162, %s176
      %p178 = scmp.eq.s32.totalorder %s26, 0
      %p179 = por %p177, %p178
      %s181 = sadd.s32 %s180, 1
      %p184 = scmp.eq.s32.totalorder %s20, 1
      %p185 = scmp.ne.s32.totalorder %s180, %s182
      %p186 = scmp.eq.s32.totalorder %s20, 0
      %p187 = por %p185, %p186
      %p188 = scmp.ne.s32.totalorder %s180, %s182
      %p189 = scmp.eq.s32.totalorder %s25, 1
      %p190 = por %p188, %p189
      %p191 = scmp.ne.s32.totalorder %s182, %s183
      %p192 = scmp.eq.s32.totalorder %s25, 0
      %p193 = por %p191, %p192
      %p194 = scmp.ne.s32.totalorder %s182, %s183
      %p195 = scmp.eq.s32.totalorder %s26, 1
      %p196 = por %p194, %p195
      %p198 = scmp.ne.s32.totalorder %s183, %s197
      %p199 = scmp.eq.s32.totalorder %s26, 0
      %p200 = por %p198, %p199
      %s202 = sadd.s32 %s201, 1
      %p205 = scmp.eq.s32.totalorder %s20, 1
      %p206 = scmp.ne.s32.totalorder %s201, %s203
      %p207 = scmp.eq.s32.totalorder %s20, 0
      %p208 = por %p206, %p207
      %p209 = scmp.ne.s32.totalorder %s201, %s203
      %p210 = scmp.eq.s32.totalorder %s25, 1
      %p211 = por %p209, %p210
      %p212 = scmp.ne.s32.totalorder %s203, %s204
      %p213 = scmp.eq.s32.totalorder %s25, 0
      %p214 = por %p212, %p213
      %p215 = scmp.ne.s32.totalorder %s203, %s204
      %p216 = scmp.eq.s32.totalorder %s26, 1
      %p217 = por %p215, %p216
      %p219 = scmp.ne.s32.totalorder %s204, %s218
      %p220 = scmp.eq.s32.totalorder %s26, 0
      %p221 = por %p219, %p220
      %s222 = ssub.s32 %s20, %s27
      %p223 = scmp.eq.s32.totalorder %s222, 0
      %s225 = sadd.s32 %s224, 1
      %s226 = scalar_select %p223, %s224, %s225
      %p229 = pneg %p223
      %p230 = scmp.eq.s32.totalorder %s20, 1
      %p231 = por %p229, %p230
      %p232 = scmp.ne.s32.totalorder %s224, %s227
      %p233 = scmp.eq.s32.totalorder %s20, 0
      %p234 = por %p232, %p233
      %p235 = scmp.ne.s32.totalorder %s224, %s227
      %p236 = scmp.eq.s32.totalorder %s25, 1
      %p237 = por %p235, %p236
      %p238 = scmp.ne.s32.totalorder %s227, %s228
      %p239 = scmp.eq.s32.totalorder %s25, 0
      %p240 = por %p238, %p239
      %p241 = scmp.ne.s32.totalorder %s227, %s228
      %p242 = scmp.eq.s32.totalorder %s26, 1
      %p243 = por %p241, %p242
      %p245 = scmp.ne.s32.totalorder %s228, %s244
      %p246 = scmp.eq.s32.totalorder %s26, 0
      %p247 = por %p245, %p246
      %p248 = scmp.le.s32.totalorder 1, %s20
      %p249 = scmp.lt.s32.totalorder %s20, 3
      %p250 = pnand %p248, %p249
      %p251 = pneg %p250
      // Predicated region
      $region9: #{tpu_custom_call.1} parent=5 // pred_check
        _
      $region10: #{tpu_custom_call.1} parent=5 // pred_check_branch
        %253 = sbr.rel (%p250) target = $region12
      $region11: #{tpu_custom_call.1} parent=5 // pred_region
        %s254 = ssub.s32 %s20, 1
        // Predicated region
        $region13: #{tpu_custom_call.1} parent=11 // pred_check
          %p255 = pneg %p67
        $region14: #{tpu_custom_call.1} parent=11 // pred_check_branch
          %257 = sbr.rel (%p255) target = $region16
        $region15: #{tpu_custom_call.1} parent=11 // pred_region
          _
        $region16: #{tpu_custom_call.1} parent=11 // pred_fallthru
          _
        // Predicated region
        $region17: #{tpu_custom_call.1} parent=11 // pred_check
          %p258 = pneg %p88
        $region18: #{tpu_custom_call.1} parent=11 // pred_check_branch
          %260 = sbr.rel (%p258) target = $region20
        $region19: #{tpu_custom_call.1} parent=11 // pred_region
          _
        $region20: #{tpu_custom_call.1} parent=11 // pred_fallthru
          _
        // Predicated region
        $region21: #{tpu_custom_call.1} parent=11 // pred_check
          %p261 = pneg %p109
        $region22: #{tpu_custom_call.1} parent=11 // pred_check_branch
          %263 = sbr.rel (%p261) target = $region24
        $region23: #{tpu_custom_call.1} parent=11 // pred_region
          _
        $region24: #{tpu_custom_call.1} parent=11 // pred_fallthru
          _
        // Predicated region
        $region25: #{tpu_custom_call.1} parent=11 // pred_check
          %p264 = pneg %p130
        $region26: #{tpu_custom_call.1} parent=11 // pred_check_branch
          %266 = sbr.rel (%p264) target = $region28
        $region27: #{tpu_custom_call.1} parent=11 // pred_region
          %s268 = ssub.s32 256, 256
          %269 = vsyncadd [#allocation3], %s268
          %s270 = sshll.u32 [#allocation2], 4
          %s271 = int_to_ptr.vmem [resolvable:$true] %s270
          %276 = dma.hbm_to_vmem [thread:$0]  %s4, 256, %s271, [#allocation3], 64, 64, 4
        $region28: #{tpu_custom_call.1} parent=11 // pred_fallthru
          _
        // Predicated region
        $region29: #{tpu_custom_call.1} parent=11 // pred_check
          %p277 = pneg %p151
        $region30: #{tpu_custom_call.1} parent=11 // pred_check_branch
          %279 = sbr.rel (%p277) target = $region32
        $region31: #{tpu_custom_call.1} parent=11 // pred_region
          _
        $region32: #{tpu_custom_call.1} parent=11 // pred_fallthru
          _
        // Predicated region
        $region33: #{tpu_custom_call.1} parent=11 // pred_check
          %p280 = pneg %p172
        $region34: #{tpu_custom_call.1} parent=11 // pred_check_branch
          %282 = sbr.rel (%p280) target = $region36
        $region35: #{tpu_custom_call.1} parent=11 // pred_region
          _
        $region36: #{tpu_custom_call.1} parent=11 // pred_fallthru
          _
        // Predicated region
        $region37: #{tpu_custom_call.1} parent=11 // pred_check
          %p283 = pneg %p193
        $region38: #{tpu_custom_call.1} parent=11 // pred_check_branch
          %285 = sbr.rel (%p283) target = $region40
        $region39: #{tpu_custom_call.1} parent=11 // pred_region
          %s287 = ssub.s32 256, 256
          %288 = vsyncadd [#allocation6], %s287
          %s289 = sshll.u32 [#allocation5], 4
          %s290 = int_to_ptr.vmem [resolvable:$true] %s289
          %295 = dma.hbm_to_vmem [thread:$0]  %s7, 256, %s290, [#allocation6], 64, 64, 4
        $region40: #{tpu_custom_call.1} parent=11 // pred_fallthru
          _
        // Predicated region
        $region41: #{tpu_custom_call.1} parent=11 // pred_check
          %p296 = pneg %p214
        $region42: #{tpu_custom_call.1} parent=11 // pred_check_branch
          %298 = sbr.rel (%p296) target = $region44
        $region43: #{tpu_custom_call.1} parent=11 // pred_region
          _
        $region44: #{tpu_custom_call.1} parent=11 // pred_fallthru
          _
      $region12: #{tpu_custom_call.1} parent=5 // pred_fallthru
        _
      %p299 = scmp.lt.s32.totalorder %s20, 2
      // Predicated region
      $region45: #{tpu_custom_call.1} parent=5 // pred_check
        %p300 = pneg %p299
      $region46: #{tpu_custom_call.1} parent=5 // pred_check_branch
        %302 = sbr.rel (%p300) target = $region48
      $region47: #{tpu_custom_call.1} parent=5 // pred_region
        // Predicated region
        $region49: #{tpu_custom_call.1} parent=47 // pred_check
          %p303 = pneg %p40
        $region50: #{tpu_custom_call.1} parent=47 // pred_check_branch
          %305 = sbr.rel (%p303) target = $region52
        $region51: #{tpu_custom_call.1} parent=47 // pred_region
          %s306 = smul.u32 2, %s20
          %p307 = scmp.lt.s32.totalorder %s306, 3
          %s308 = scalar_select %p307, %s306, 3
          %s309 = smul.addr %s308, 2
          %s310 = smul.addr %s309, 8
          %s311 = scalar_lea.vmem %s0, %s310
          %s312 = smul.u32 2, %s20
        $region52: #{tpu_custom_call.1} parent=47 // pred_fallthru
          _
      $region48: #{tpu_custom_call.1} parent=5 // pred_fallthru
        _
      %p313 = scmp.le.s32.totalorder 1, %s20
      %p314 = scmp.lt.s32.totalorder %s20, 3
      %p315 = pnand %p313, %p314
      %p316 = pneg %p315
      // Predicated region
      $region53: #{tpu_custom_call.1} parent=5 // pred_check
        _
      $region54: #{tpu_custom_call.1} parent=5 // pred_check_branch
        %318 = sbr.rel (%p315) target = $region56
      $region55: #{tpu_custom_call.1} parent=5 // pred_region
        %s319 = ssub.s32 %s20, 1
        // Predicated region
        $region57: #{tpu_custom_call.1} parent=55 // pred_check
          %p320 = pneg %p130
        $region58: #{tpu_custom_call.1} parent=55 // pred_check_branch
          %322 = sbr.rel (%p320) target = $region60
        $region59: #{tpu_custom_call.1} parent=55 // pred_region
          %323 = dma.done [#allocation3], 256
        $region60: #{tpu_custom_call.1} parent=55 // pred_fallthru
          _
        // Predicated region
        $region61: #{tpu_custom_call.1} parent=55 // pred_check
          %p324 = pneg %p193
        $region62: #{tpu_custom_call.1} parent=55 // pred_check_branch
          %326 = sbr.rel (%p324) target = $region64
        $region63: #{tpu_custom_call.1} parent=55 // pred_region
          %327 = dma.done [#allocation6], 256
        $region64: #{tpu_custom_call.1} parent=55 // pred_fallthru
          _
        %s328 = smul.u32 2, %s25
        %p329 = scmp.lt.s32.totalorder %s328, 3
        %s330 = scalar_select %p329, %s328, 3
        %s331 = smul.addr %s330, 2
        %s332 = smul.addr %s331, 8
        %s333 = scalar_lea.vmem %s0, %s332
        %p334 = pneg %p46
        %p335 = pneg %p43
        %p336 = pneg %p67
        %p337 = pneg %p64
        %p338 = pneg %p88
        %p339 = pneg %p85
        %p340 = pneg %p109
        %p341 = pneg %p106
        %p342 = pneg %p130
        %p343 = pneg %p127
        %p344 = pneg %p151
        %p345 = pneg %p148
        %p346 = pneg %p172
        %p347 = pneg %p169
        %p348 = pneg %p193
        %p349 = pneg %p190
        %p350 = pneg %p214
        %p351 = pneg %p211
        %p352 = pneg %p240
        %p353 = pneg %p237
        %s354 = sand.u32 %s227, 1
        %s355 = scalar_lea.sflag [#allocation4], %s354
        %s356 = sand.u32 %s227, 1
        %s357 = smul.addr %s356, 32
        %s358 = scalar_lea.vmem [#allocation7], %s357
        %s359 = smul.u32 2, %s25
        %p360 = scmp.lt.s32.totalorder %s359, 3
        %s361 = scalar_select %p360, %s359, 3
        %s362 = smul.addr %s361, 2
        %s363 = smul.addr %s362, 8
        %s364 = scalar_lea.vmem %s0, %s363
        %s365 = smul.u32 2, %s25
        %s366 = smul.u32 2, %s25
        %v370 = vld [vmem:[%s364] sm:$0xff]
        %v371 = vld [vmem:[%s364 + $0x8] sm:$0xff]
        %v372 = vld [vmem:[%s364 + $0x10] sm:$0xff]
        %v373 = vld [vmem:[%s364 + $0x18] sm:$0xff]
        %v374 = vld [vmem:[%s1] sm:$0x1]
        %v375 = vld [vmem:[%s2] sm:$0x1]
        %vm376 = vcmask 261120
        %v377 = vsel %vm376, %v370, 0.0
        %378 = vadd.xlane.f32.xlu0 %v377
        %v379 = vpop.xlane.xlu0 %378
        %v380 = vsel %vm376, %v371, 0.0
        %381 = vadd.xlane.f32.xlu0 %v380
        %v382 = vpop.xlane.xlu0 %381
        %v383 = vsel %vm376, %v372, 0.0
        %384 = vadd.xlane.f32.xlu0 %v383
        %v385 = vpop.xlane.xlu0 %384
        %v386 = vsel %vm376, %v373, 0.0
        %387 = vadd.xlane.f32.xlu0 %v386
        %v388 = vpop.xlane.xlu0 %387
        %v389 = vrcp.pop 32.0
        %v390 = vmul.f32 %v379, %v389
        %v391 = vmul.f32 %v382, %v389
        %v392 = vmul.f32 %v385, %v389
        %v393 = vmul.f32 %v388, %v389
        %v394 = vsub.f32 %v370, %v390
        %v395 = vsub.f32 %v371, %v391
        %v396 = vsub.f32 %v372, %v392
        %v397 = vsub.f32 %v373, %v393
        %v398 = vmul.f32 %v394, %v394
        %v399 = vmul.f32 %v395, %v395
        %v400 = vmul.f32 %v396, %v396
        %v401 = vmul.f32 %v397, %v397
        %v402 = vsel %vm376, %v398, 0.0
        %403 = vadd.xlane.f32.xlu0 %v402
        %v404 = vpop.xlane.xlu0 %403
        %v405 = vsel %vm376, %v399, 0.0
        %406 = vadd.xlane.f32.xlu0 %v405
        %v407 = vpop.xlane.xlu0 %406
        %v408 = vsel %vm376, %v400, 0.0
        %409 = vadd.xlane.f32.xlu0 %v408
        %v410 = vpop.xlane.xlu0 %409
        %v411 = vsel %vm376, %v401, 0.0
        %412 = vadd.xlane.f32.xlu0 %v411
        %v413 = vpop.xlane.xlu0 %412
        %v414 = vmul.f32 %v404, %v389
        %v415 = vmul.f32 %v407, %v389
        %v416 = vmul.f32 %v410, %v389
        %v417 = vmul.f32 %v413, %v389
        %v418 = vadd.f32 %v414, 1e-05
        %v419 = vadd.f32 %v415, 1e-05
        %v420 = vadd.f32 %v416, 1e-05
        %v421 = vadd.f32 %v417, 1e-05
        %v422 = vrsqrt.pop %v418
        %v423 = vrsqrt.pop %v419
        %v424 = vrsqrt.pop %v420
        %v425 = vrsqrt.pop %v421
        %v426 = vmul.f32 %v394, %v422
        %v427 = vmul.f32 %v395, %v423
        %v428 = vmul.f32 %v396, %v424
        %v429 = vmul.f32 %v397, %v425
        %v431 = vlaneseq
        %v432 = vshrl.u32 %v431, 7
        %v433 = vsub.s32 0, %v432
        %v434 = vrot.slane %v374, %v433
        %v436 = vmul.f32 %v426, %v434
        %v437 = vmul.f32 %v427, %v434
        %v438 = vmul.f32 %v428, %v434
        %v439 = vmul.f32 %v429, %v434
        %v441 = vlaneseq
        %v442 = vshrl.u32 %v441, 7
        %v443 = vsub.s32 0, %v442
        %v444 = vrot.slane %v375, %v443
        %v446 = vadd.f32 %v436, %v444
        %v447 = vadd.f32 %v437, %v444
        %v448 = vadd.f32 %v438, %v444
        %v449 = vadd.f32 %v439, %v444
        %v450 = vpack.c.bf16 %v447, %v446
        %v451 = vpack.c.bf16 %v449, %v448
        %v452 = vld [vmem:[%s3] sm:$0xf]
        %v453 = vld [vmem:[%s3 + $0x4] sm:$0xf]
        %v454 = vld [vmem:[%s3 + $0x8] sm:$0xf]
        %v455 = vld [vmem:[%s3 + $0xc] sm:$0xf]
        %v460 = vunpack.c.l.b16 %v452
        %v461 = vunpack.c.l.b16 %v453
        %v462 = vunpack.c.l.b16 %v454
        %v463 = vunpack.c.l.b16 %v455
        %v464 = vpack.c.b16 %v461, %v460
        %v465 = vpack.c.b16 %v463, %v462
        %v469 = vsel %vm376, %v450, 0
        %v472 = vsel %vm376, %v451, 0
        %474 = vmatprep.subr.bf16.mxu0 0
        %475 = vmatpush1.bf16.msra.mxu0 0
        %476 = vmatprep.subr.bf16.mxu0 0
        %477 = vmatpush1.bf16.msra.mxu0 0
        %478 = vmatprep.subr.bf16.mxu0 0
        %479 = vmatpush1.bf16.msra.mxu0 0
        %480 = vmatprep.subr.bf16.mxu0 0
        %481 = vmatpush1.bf16.msra.mxu0 0
        %482 = vmatprep.subr.bf16.mxu0 0
        %483 = vmatpush1.bf16.msra.mxu0 0
        %484 = vmatprep.subr.bf16.mxu0 0
        %485 = vmatpush1.bf16.msra.mxu0 0
        %486 = vmatprep.subr.bf16.mxu0 0
        %487 = vmatpush1.bf16.msra.mxu0 %v465
        %488 = vmatprep.subr.bf16.mxu0 0
        %489 = vmatpush1.bf16.msra.mxu0 %v464
        %490 = vmatprep.subr.bf16.mxu0 0
        %491 = vmatpush2.bf16.msra.mxu0 0
        %492 = vmatprep.subr.bf16.mxu0 0
        %493 = vmatpush2.bf16.msra.mxu0 0
        %494 = vmatprep.subr.bf16.mxu0 0
        %495 = vmatpush2.bf16.msra.mxu0 0
        %496 = vmatprep.subr.bf16.mxu0 0
        %497 = vmatpush2.bf16.msra.mxu0 0
        %498 = vmatprep.subr.bf16.mxu0 0
        %499 = vmatpush2.bf16.msra.mxu0 0
        %500 = vmatprep.subr.bf16.mxu0 0
        %501 = vmatpush2.bf16.msra.mxu0 0
        %502 = vmatprep.subr.bf16.mxu0 0
        %503 = vmatpush2.bf16.msra.mxu0 0
        %504 = vmatprep.subr.bf16.mxu0 0
        %505 = vmatpush2.bf16.msra.mxu0 0
        %506 = vmatprep.mubr.bf16.mxu0 0
        %507 = vmatmul.mubr.bf16.gmra.mxu0 %v469
        %v508 = vpop.f32.mrf.mxu0
        %v509 = vadd.f32 0.0, %v508
        %v510 = vpop.f32.mrf.mxu0
        %v511 = vpop.f32.mrf.mxu0
        %v512 = vadd.f32 0.0, %v511
        %v513 = vpop.f32.mrf.mxu0
        %514 = vmatprep.mubr.bf16.mxu0 0
        %515 = vmatmul.mubr.bf16.gmra.mxu0 %v472
        %v516 = vpop.f32.mrf.mxu0
        %v517 = vadd.f32 0.0, %v516
        %v518 = vpop.f32.mrf.mxu0
        %v519 = vpop.f32.mrf.mxu0
        %v520 = vadd.f32 0.0, %v519
        %v521 = vpop.f32.mrf.mxu0
        %522 = vdwg.mxu0
        %v523 = vpack.c.bf16 %v512, %v509
        %v524 = vpack.c.bf16 %v520, %v517
        %v525 = vlaneseq
        %v526 = vshrl.u32 %v525, 7
        %v527 = vadd.s32 %v526, 8
        %v528 = vlaneseq
        %v529 = vand.u32 %v528, 127
        %vm530 = vcmp.le.s32.totalorder %v529, %v526
        %vm531 = vcmp.le.s32.totalorder %v529, %v527
        %v532 = vsel %vm530, 0.0, -inf
        %v533 = vsel %vm531, 0.0, -inf
        %vm534 = vcmp.ge.s32.totalorder %v529, 0
        %vm535 = vcmp.lt.s32.totalorder %v529, 16
        %vm536 = vmand %vm534, %vm535
        %v537 = vsel %vm536, 1, 0
        %vm538 = vcmp.eq.s32.totalorder %v537, 1
        %vm539 = vmpackc.low %vm538, %vm538
        %v540 = vsel %vm539, 65537, 0
        %v541 = vlaneseq
        %v542 = vshrl.u32 %v541, 7
        %v543 = vsub.s32 0, %v542
        %v544 = vrot.slane %v540, %v543
        %vm545 = vcmp.ne.s16.totalorder %v544, 0
        %v546 = vsel %vm545, %v523, 0
        %v547 = vsel %vm545, %v524, 0
        %548 = vrot.lane.b32.xlu0 %v544, 64
        %v549 = vpop.permute.xlu0 %548
        %vm550 = vcmp.ne.s16.totalorder %v549, 0
        %v551 = vsel %vm550, %v523, 0
        %v552 = vsel %vm550, %v524, 0
        %554 = vrot.lane.b32.xlu0 %v523, 96
        %v555 = vpop.permute.xlu0 %554
        %v557 = vsel %vm376, %v546, 0
        %v560 = vsel %vm376, %v555, 0
        %562 = vmatprep.subr.bf16.mxu0 0
        %563 = vmatpush1.bf16.xpose.msra.mxu0 0
        %564 = vmatprep.subr.bf16.mxu0 0
        %565 = vmatpush1.bf16.xpose.msra.mxu0 0
        %566 = vmatprep.subr.bf16.mxu0 0
        %567 = vmatpush1.bf16.xpose.msra.mxu0 0
        %568 = vmatprep.subr.bf16.mxu0 0
        %569 = vmatpush1.bf16.xpose.msra.mxu0 0
        %570 = vmatprep.subr.bf16.mxu0 0
        %571 = vmatpush1.bf16.xpose.msra.mxu0 0
        %572 = vmatprep.subr.bf16.mxu0 0
        %573 = vmatpush1.bf16.xpose.msra.mxu0 0
        %574 = vmatprep.subr.bf16.mxu0 0
        %575 = vmatpush1.bf16.xpose.msra.mxu0 0
        %576 = vmatprep.subr.bf16.mxu0 0
        %577 = vmatpush1.bf16.xpose.msra.mxu0 %v560
        %578 = vmatprep.subr.bf16.mxu0 0
        %579 = vmatpush2.bf16.xpose.msra.mxu0 0
        %580 = vmatprep.subr.bf16.mxu0 0
        %581 = vmatpush2.bf16.xpose.msra.mxu0 0
        %582 = vmatprep.subr.bf16.mxu0 0
        %583 = vmatpush2.bf16.xpose.msra.mxu0 0
        %584 = vmatprep.subr.bf16.mxu0 0
        %585 = vmatpush2.bf16.xpose.msra.mxu0 0
        %586 = vmatprep.subr.bf16.mxu0 0
        %587 = vmatpush2.bf16.xpose.msra.mxu0 0
        %588 = vmatprep.subr.bf16.mxu0 0
        %589 = vmatpush2.bf16.xpose.msra.mxu0 0
        %590 = vmatprep.subr.bf16.mxu0 0
        %591 = vmatpush2.bf16.xpose.msra.mxu0 0
        %592 = vmatprep.subr.bf16.mxu0 0
        %593 = vmatpush2.bf16.xpose.msra.mxu0 0
        %594 = vmatprep.mubr.bf16.mxu0 0
        %595 = vmatmul.mubr.bf16.gmra.mxu0 %v557
        %v596 = vpop.f32.mrf.mxu0
        %v597 = vadd.f32 %v532, %v596
        %v598 = vpop.f32.mrf.mxu0
        %v599 = vpop.f32.mrf.mxu0
        %v600 = vadd.f32 %v533, %v599
        %v601 = vpop.f32.mrf.mxu0
        %602 = vdwg.mxu0
        %604 = vrot.lane.b32.xlu0 %v524, 96
        %v605 = vpop.permute.xlu0 %604
        %v607 = vsel %vm376, %v547, 0
        %v610 = vsel %vm376, %v605, 0
        %612 = vmatprep.subr.bf16.mxu0 0
        %613 = vmatpush1.bf16.xpose.msra.mxu0 0
        %614 = vmatprep.subr.bf16.mxu0 0
        %615 = vmatpush1.bf16.xpose.msra.mxu0 0
        %616 = vmatprep.subr.bf16.mxu0 0
        %617 = vmatpush1.bf16.xpose.msra.mxu0 0
        %618 = vmatprep.subr.bf16.mxu0 0
        %619 = vmatpush1.bf16.xpose.msra.mxu0 0
        %620 = vmatprep.subr.bf16.mxu0 0
        %621 = vmatpush1.bf16.xpose.msra.mxu0 0
        %622 = vmatprep.subr.bf16.mxu0 0
        %623 = vmatpush1.bf16.xpose.msra.mxu0 0
        %624 = vmatprep.subr.bf16.mxu0 0
        %625 = vmatpush1.bf16.xpose.msra.mxu0 0
        %626 = vmatprep.subr.bf16.mxu0 0
        %627 = vmatpush1.bf16.xpose.msra.mxu0 %v610
        %628 = vmatprep.subr.bf16.mxu0 0
        %629 = vmatpush2.bf16.xpose.msra.mxu0 0
        %630 = vmatprep.subr.bf16.mxu0 0
        %631 = vmatpush2.bf16.xpose.msra.mxu0 0
        %632 = vmatprep.subr.bf16.mxu0 0
        %633 = vmatpush2.bf16.xpose.msra.mxu0 0
        %634 = vmatprep.subr.bf16.mxu0 0
        %635 = vmatpush2.bf16.xpose.msra.mxu0 0
        %636 = vmatprep.subr.bf16.mxu0 0
        %637 = vmatpush2.bf16.xpose.msra.mxu0 0
        %638 = vmatprep.subr.bf16.mxu0 0
        %639 = vmatpush2.bf16.xpose.msra.mxu0 0
        %640 = vmatprep.subr.bf16.mxu0 0
        %641 = vmatpush2.bf16.xpose.msra.mxu0 0
        %642 = vmatprep.subr.bf16.mxu0 0
        %643 = vmatpush2.bf16.xpose.msra.mxu0 0
        %644 = vmatprep.mubr.bf16.mxu0 0
        %645 = vmatmul.mubr.bf16.gmra.mxu0 %v607
        %v646 = vpop.f32.mrf.mxu0
        %v647 = vadd.f32 %v532, %v646
        %v648 = vpop.f32.mrf.mxu0
        %v649 = vpop.f32.mrf.mxu0
        %v650 = vadd.f32 %v533, %v649
        %v651 = vpop.f32.mrf.mxu0
        %652 = vdwg.mxu0
        %vm653 = vcmask 130048
        %v654 = vsel %vm653, %v597, -inf
        %655 = vmax.xlane.f32.xlu0 %v654
        %v656 = vpop.xlane.xlu0 %655
        %v657 = vsel %vm653, %v600, -inf
        %658 = vmax.xlane.f32.xlu0 %v657
        %v659 = vpop.xlane.xlu0 %658
        %v660 = vsel %vm653, %v647, -inf
        %661 = vmax.xlane.f32.xlu0 %v660
        %v662 = vpop.xlane.xlu0 %661
        %v663 = vsel %vm653, %v650, -inf
        %664 = vmax.xlane.f32.xlu0 %v663
        %v665 = vpop.xlane.xlu0 %664
        %v666 = vsub.f32 %v597, %v656
        %v667 = vsub.f32 %v600, %v659
        %v668 = vsub.f32 %v647, %v662
        %v669 = vsub.f32 %v650, %v665
        %v670 = vmul.f32 %v666, 1.442695
        %v671 = vpow.pop %v670
        %v672 = vmul.f32 %v667, 1.442695
        %v673 = vpow.pop %v672
        %v674 = vmul.f32 %v668, 1.442695
        %v675 = vpow.pop %v674
        %v676 = vmul.f32 %v669, 1.442695
        %v677 = vpow.pop %v676
        %v678 = vsel %vm653, %v671, 0.0
        %679 = vadd.xlane.f32.xlu0 %v678
        %v680 = vpop.xlane.xlu0 %679
        %v681 = vsel %vm653, %v673, 0.0
        %682 = vadd.xlane.f32.xlu0 %v681
        %v683 = vpop.xlane.xlu0 %682
        %v684 = vsel %vm653, %v675, 0.0
        %685 = vadd.xlane.f32.xlu0 %v684
        %v686 = vpop.xlane.xlu0 %685
        %v687 = vsel %vm653, %v677, 0.0
        %688 = vadd.xlane.f32.xlu0 %v687
        %v689 = vpop.xlane.xlu0 %688
        %v690 = vrcp.pop %v680
        %v691 = vrcp.pop %v683
        %v692 = vrcp.pop %v686
        %v693 = vrcp.pop %v689
        %v694 = vmul.f32 %v671, %v690
        %v695 = vmul.f32 %v673, %v691
        %v696 = vmul.f32 %v675, %v692
        %v697 = vmul.f32 %v677, %v693
        %v698 = vpack.c.bf16 %v695, %v694
        %v699 = vpack.c.bf16 %v697, %v696
        %vm700 = vcmp.ge.s32.totalorder %v529, 16
        %vm701 = vcmp.lt.s32.totalorder %v529, 32
        %vm702 = vmand %vm700, %vm701
        %v703 = vsel %vm702, 1, 0
        %vm704 = vcmp.eq.s32.totalorder %v703, 1
        %vm705 = vmpackc.low %vm704, %vm704
        %v706 = vsel %vm705, 65537, 0
        %v707 = vlaneseq
        %v708 = vshrl.u32 %v707, 7
        %v709 = vsub.s32 0, %v708
        %v710 = vrot.slane %v706, %v709
        %vm711 = vcmp.ne.s16.totalorder %v710, 0
        %v712 = vsel %vm711, %v523, 0
        %v713 = vsel %vm711, %v524, 0
        %714 = vrot.lane.b32.xlu0 %v710, 64
        %v715 = vpop.permute.xlu0 %714
        %vm716 = vcmp.ne.s16.totalorder %v715, 0
        %v717 = vsel %vm716, %v523, 0
        %v718 = vsel %vm716, %v524, 0
        %v720 = vsel %vm376, %v712, 0
        %722 = vmatprep.subr.bf16.mxu0 0
        %723 = vmatpush1.bf16.xpose.msra.mxu0 0
        %724 = vmatprep.subr.bf16.mxu0 0
        %725 = vmatpush1.bf16.xpose.msra.mxu0 0
        %726 = vmatprep.subr.bf16.mxu0 0
        %727 = vmatpush1.bf16.xpose.msra.mxu0 0
        %728 = vmatprep.subr.bf16.mxu0 0
        %729 = vmatpush1.bf16.xpose.msra.mxu0 0
        %730 = vmatprep.subr.bf16.mxu0 0
        %731 = vmatpush1.bf16.xpose.msra.mxu0 0
        %732 = vmatprep.subr.bf16.mxu0 0
        %733 = vmatpush1.bf16.xpose.msra.mxu0 0
        %734 = vmatprep.subr.bf16.mxu0 0
        %735 = vmatpush1.bf16.xpose.msra.mxu0 0
        %736 = vmatprep.subr.bf16.mxu0 0
        %737 = vmatpush1.bf16.xpose.msra.mxu0 %v560
        %738 = vmatprep.subr.bf16.mxu0 0
        %739 = vmatpush2.bf16.xpose.msra.mxu0 0
        %740 = vmatprep.subr.bf16.mxu0 0
        %741 = vmatpush2.bf16.xpose.msra.mxu0 0
        %742 = vmatprep.subr.bf16.mxu0 0
        %743 = vmatpush2.bf16.xpose.msra.mxu0 0
        %744 = vmatprep.subr.bf16.mxu0 0
        %745 = vmatpush2.bf16.xpose.msra.mxu0 0
        %746 = vmatprep.subr.bf16.mxu0 0
        %747 = vmatpush2.bf16.xpose.msra.mxu0 0
        %748 = vmatprep.subr.bf16.mxu0 0
        %749 = vmatpush2.bf16.xpose.msra.mxu0 0
        %750 = vmatprep.subr.bf16.mxu0 0
        %751 = vmatpush2.bf16.xpose.msra.mxu0 0
        %752 = vmatprep.subr.bf16.mxu0 0
        %753 = vmatpush2.bf16.xpose.msra.mxu0 0
        %754 = vmatprep.mubr.bf16.mxu0 0
        %755 = vmatmul.mubr.bf16.gmra.mxu0 %v720
        %v756 = vpop.f32.mrf.mxu0
        %v757 = vadd.f32 %v532, %v756
        %v758 = vpop.f32.mrf.mxu0
        %v759 = vpop.f32.mrf.mxu0
        %v760 = vadd.f32 %v533, %v759
        %v761 = vpop.f32.mrf.mxu0
        %762 = vdwg.mxu0
        %v764 = vsel %vm376, %v713, 0
        %766 = vmatprep.subr.bf16.mxu0 0
        %767 = vmatpush1.bf16.xpose.msra.mxu0 0
        %768 = vmatprep.subr.bf16.mxu0 0
        %769 = vmatpush1.bf16.xpose.msra.mxu0 0
        %770 = vmatprep.subr.bf16.mxu0 0
        %771 = vmatpush1.bf16.xpose.msra.mxu0 0
        %772 = vmatprep.subr.bf16.mxu0 0
        %773 = vmatpush1.bf16.xpose.msra.mxu0 0
        %774 = vmatprep.subr.bf16.mxu0 0
        %775 = vmatpush1.bf16.xpose.msra.mxu0 0
        %776 = vmatprep.subr.bf16.mxu0 0
        %777 = vmatpush1.bf16.xpose.msra.mxu0 0
        %778 = vmatprep.subr.bf16.mxu0 0
        %779 = vmatpush1.bf16.xpose.msra.mxu0 0
        %780 = vmatprep.subr.bf16.mxu0 0
        %781 = vmatpush1.bf16.xpose.msra.mxu0 %v610
        %782 = vmatprep.subr.bf16.mxu0 0
        %783 = vmatpush2.bf16.xpose.msra.mxu0 0
        %784 = vmatprep.subr.bf16.mxu0 0
        %785 = vmatpush2.bf16.xpose.msra.mxu0 0
        %786 = vmatprep.subr.bf16.mxu0 0
        %787 = vmatpush2.bf16.xpose.msra.mxu0 0
        %788 = vmatprep.subr.bf16.mxu0 0
        %789 = vmatpush2.bf16.xpose.msra.mxu0 0
        %790 = vmatprep.subr.bf16.mxu0 0
        %791 = vmatpush2.bf16.xpose.msra.mxu0 0
        %792 = vmatprep.subr.bf16.mxu0 0
        %793 = vmatpush2.bf16.xpose.msra.mxu0 0
        %794 = vmatprep.subr.bf16.mxu0 0
        %795 = vmatpush2.bf16.xpose.msra.mxu0 0
        %796 = vmatprep.subr.bf16.mxu0 0
        %797 = vmatpush2.bf16.xpose.msra.mxu0 0
        %798 = vmatprep.mubr.bf16.mxu0 0
        %799 = vmatmul.mubr.bf16.gmra.mxu0 %v764
        %v800 = vpop.f32.mrf.mxu0
        %v801 = vadd.f32 %v532, %v800
        %v802 = vpop.f32.mrf.mxu0
        %v803 = vpop.f32.mrf.mxu0
        %v804 = vadd.f32 %v533, %v803
        %v805 = vpop.f32.mrf.mxu0
        %806 = vdwg.mxu0
        %v807 = vsel %vm653, %v757, -inf
        %808 = vmax.xlane.f32.xlu0 %v807
        %v809 = vpop.xlane.xlu0 %808
        %v810 = vsel %vm653, %v760, -inf
        %811 = vmax.xlane.f32.xlu0 %v810
        %v812 = vpop.xlane.xlu0 %811
        %v813 = vsel %vm653, %v801, -inf
        %814 = vmax.xlane.f32.xlu0 %v813
        %v815 = vpop.xlane.xlu0 %814
        %v816 = vsel %vm653, %v804, -inf
        %817 = vmax.xlane.f32.xlu0 %v816
        %v818 = vpop.xlane.xlu0 %817
        %v819 = vsub.f32 %v757, %v809
        %v820 = vsub.f32 %v760, %v812
        %v821 = vsub.f32 %v801, %v815
        %v822 = vsub.f32 %v804, %v818
        %v823 = vmul.f32 %v819, 1.442695
        %v824 = vpow.pop %v823
        %v825 = vmul.f32 %v820, 1.442695
        %v826 = vpow.pop %v825
        %v827 = vmul.f32 %v821, 1.442695
        %v828 = vpow.pop %v827
        %v829 = vmul.f32 %v822, 1.442695
        %v830 = vpow.pop %v829
        %v831 = vsel %vm653, %v824, 0.0
        %832 = vadd.xlane.f32.xlu0 %v831
        %v833 = vpop.xlane.xlu0 %832
        %v834 = vsel %vm653, %v826, 0.0
        %835 = vadd.xlane.f32.xlu0 %v834
        %v836 = vpop.xlane.xlu0 %835
        %v837 = vsel %vm653, %v828, 0.0
        %838 = vadd.xlane.f32.xlu0 %v837
        %v839 = vpop.xlane.xlu0 %838
        %v840 = vsel %vm653, %v830, 0.0
        %841 = vadd.xlane.f32.xlu0 %v840
        %v842 = vpop.xlane.xlu0 %841
        %v843 = vrcp.pop %v833
        %v844 = vrcp.pop %v836
        %v845 = vrcp.pop %v839
        %v846 = vrcp.pop %v842
        %v847 = vmul.f32 %v824, %v843
        %v848 = vmul.f32 %v826, %v844
        %v849 = vmul.f32 %v828, %v845
        %v850 = vmul.f32 %v830, %v846
        %v851 = vpack.c.bf16 %v848, %v847
        %v852 = vpack.c.bf16 %v850, %v849
        %854 = vrot.lane.b32.xlu0 %v717, 64
        %v855 = vpop.permute.xlu0 %854
        %v858 = vsel %vm653, %v851, 0
        %860 = vmatprep.subr.bf16.mxu0 0
        %861 = vmatpush1.bf16.msra.mxu0 0
        %862 = vmatprep.subr.bf16.mxu0 0
        %863 = vmatpush1.bf16.msra.mxu0 0
        %864 = vmatprep.subr.bf16.mxu0 0
        %865 = vmatpush1.bf16.msra.mxu0 0
        %866 = vmatprep.subr.bf16.mxu0 0
        %867 = vmatpush1.bf16.msra.mxu0 0
        %868 = vmatprep.subr.bf16.mxu0 0
        %869 = vmatpush1.bf16.msra.mxu0 0
        %870 = vmatprep.subr.bf16.mxu0 0
        %871 = vmatpush1.bf16.msra.mxu0 0
        %872 = vmatprep.subr.bf16.mxu0 0
        %873 = vmatpush1.bf16.msra.mxu0 0
        %874 = vmatprep.subr.bf16.mxu0 0
        %875 = vmatpush1.bf16.msra.mxu0 %v855
        %876 = vmatprep.subr.bf16.mxu0 0
        %877 = vmatpush2.bf16.msra.mxu0 0
        %878 = vmatprep.subr.bf16.mxu0 0
        %879 = vmatpush2.bf16.msra.mxu0 0
        %880 = vmatprep.subr.bf16.mxu0 0
        %881 = vmatpush2.bf16.msra.mxu0 0
        %882 = vmatprep.subr.bf16.mxu0 0
        %883 = vmatpush2.bf16.msra.mxu0 0
        %884 = vmatprep.subr.bf16.mxu0 0
        %885 = vmatpush2.bf16.msra.mxu0 0
        %886 = vmatprep.subr.bf16.mxu0 0
        %887 = vmatpush2.bf16.msra.mxu0 0
        %888 = vmatprep.subr.bf16.mxu0 0
        %889 = vmatpush2.bf16.msra.mxu0 0
        %890 = vmatprep.subr.bf16.mxu0 0
        %891 = vmatpush2.bf16.msra.mxu0 0
        %892 = vmatprep.mubr.bf16.mxu0 0
        %893 = vmatmul.mubr.bf16.gmra.mxu0 %v858
        %v894 = vpop.f32.mrf.mxu0
        %v895 = vadd.f32 0.0, %v894
        %v896 = vpop.f32.mrf.mxu0
        %v897 = vpop.f32.mrf.mxu0
        %v898 = vadd.f32 0.0, %v897
        %v899 = vpop.f32.mrf.mxu0
        %900 = vdwg.mxu0
        %902 = vrot.lane.b32.xlu0 %v718, 64
        %v903 = vpop.permute.xlu0 %902
        %v906 = vsel %vm653, %v852, 0
        %908 = vmatprep.subr.bf16.mxu0 0
        %909 = vmatpush1.bf16.msra.mxu0 0
        %910 = vmatprep.subr.bf16.mxu0 0
        %911 = vmatpush1.bf16.msra.mxu0 0
        %912 = vmatprep.subr.bf16.mxu0 0
        %913 = vmatpush1.bf16.msra.mxu0 0
        %914 = vmatprep.subr.bf16.mxu0 0
        %915 = vmatpush1.bf16.msra.mxu0 0
        %916 = vmatprep.subr.bf16.mxu0 0
        %917 = vmatpush1.bf16.msra.mxu0 0
        %918 = vmatprep.subr.bf16.mxu0 0
        %919 = vmatpush1.bf16.msra.mxu0 0
        %920 = vmatprep.subr.bf16.mxu0 0
        %921 = vmatpush1.bf16.msra.mxu0 0
        %922 = vmatprep.subr.bf16.mxu0 0
        %923 = vmatpush1.bf16.msra.mxu0 %v903
        %924 = vmatprep.subr.bf16.mxu0 0
        %925 = vmatpush2.bf16.msra.mxu0 0
        %926 = vmatprep.subr.bf16.mxu0 0
        %927 = vmatpush2.bf16.msra.mxu0 0
        %928 = vmatprep.subr.bf16.mxu0 0
        %929 = vmatpush2.bf16.msra.mxu0 0
        %930 = vmatprep.subr.bf16.mxu0 0
        %931 = vmatpush2.bf16.msra.mxu0 0
        %932 = vmatprep.subr.bf16.mxu0 0
        %933 = vmatpush2.bf16.msra.mxu0 0
        %934 = vmatprep.subr.bf16.mxu0 0
        %935 = vmatpush2.bf16.msra.mxu0 0
        %936 = vmatprep.subr.bf16.mxu0 0
        %937 = vmatpush2.bf16.msra.mxu0 0
        %938 = vmatprep.subr.bf16.mxu0 0
        %939 = vmatpush2.bf16.msra.mxu0 0
        %940 = vmatprep.mubr.bf16.mxu0 0
        %941 = vmatmul.mubr.bf16.gmra.mxu0 %v906
        %v942 = vpop.f32.mrf.mxu0
        %v943 = vadd.f32 0.0, %v942
        %v944 = vpop.f32.mrf.mxu0
        %v945 = vpop.f32.mrf.mxu0
        %v946 = vadd.f32 0.0, %v945
        %v947 = vpop.f32.mrf.mxu0
        %948 = vdwg.mxu0
        %950 = vrot.lane.b32.xlu0 %v551, 64
        %v951 = vpop.permute.xlu0 %950
        %v954 = vsel %vm653, %v698, 0
        %956 = vmatprep.subr.bf16.mxu0 0
        %957 = vmatpush1.bf16.msra.mxu0 0
        %958 = vmatprep.subr.bf16.mxu0 0
        %959 = vmatpush1.bf16.msra.mxu0 0
        %960 = vmatprep.subr.bf16.mxu0 0
        %961 = vmatpush1.bf16.msra.mxu0 0
        %962 = vmatprep.subr.bf16.mxu0 0
        %963 = vmatpush1.bf16.msra.mxu0 0
        %964 = vmatprep.subr.bf16.mxu0 0
        %965 = vmatpush1.bf16.msra.mxu0 0
        %966 = vmatprep.subr.bf16.mxu0 0
        %967 = vmatpush1.bf16.msra.mxu0 0
        %968 = vmatprep.subr.bf16.mxu0 0
        %969 = vmatpush1.bf16.msra.mxu0 0
        %970 = vmatprep.subr.bf16.mxu0 0
        %971 = vmatpush1.bf16.msra.mxu0 %v951
        %972 = vmatprep.subr.bf16.mxu0 0
        %973 = vmatpush2.bf16.msra.mxu0 0
        %974 = vmatprep.subr.bf16.mxu0 0
        %975 = vmatpush2.bf16.msra.mxu0 0
        %976 = vmatprep.subr.bf16.mxu0 0
        %977 = vmatpush2.bf16.msra.mxu0 0
        %978 = vmatprep.subr.bf16.mxu0 0
        %979 = vmatpush2.bf16.msra.mxu0 0
        %980 = vmatprep.subr.bf16.mxu0 0
        %981 = vmatpush2.bf16.msra.mxu0 0
        %982 = vmatprep.subr.bf16.mxu0 0
        %983 = vmatpush2.bf16.msra.mxu0 0
        %984 = vmatprep.subr.bf16.mxu0 0
        %985 = vmatpush2.bf16.msra.mxu0 0
        %986 = vmatprep.subr.bf16.mxu0 0
        %987 = vmatpush2.bf16.msra.mxu0 0
        %988 = vmatprep.mubr.bf16.mxu0 0
        %989 = vmatmul.mubr.bf16.gmra.mxu0 %v954
        %v990 = vpop.f32.mrf.mxu0
        %v991 = vadd.f32 %v895, %v990
        %v992 = vpop.f32.mrf.mxu0
        %v993 = vpop.f32.mrf.mxu0
        %v994 = vadd.f32 %v898, %v993
        %v995 = vpop.f32.mrf.mxu0
        %996 = vdwg.mxu0
        %998 = vrot.lane.b32.xlu0 %v552, 64
        %v999 = vpop.permute.xlu0 %998
        %v1002 = vsel %vm653, %v699, 0
        %1004 = vmatprep.subr.bf16.mxu0 0
        %1005 = vmatpush1.bf16.msra.mxu0 0
        %1006 = vmatprep.subr.bf16.mxu0 0
        %1007 = vmatpush1.bf16.msra.mxu0 0
        %1008 = vmatprep.subr.bf16.mxu0 0
        %1009 = vmatpush1.bf16.msra.mxu0 0
        %1010 = vmatprep.subr.bf16.mxu0 0
        %1011 = vmatpush1.bf16.msra.mxu0 0
        %1012 = vmatprep.subr.bf16.mxu0 0
        %1013 = vmatpush1.bf16.msra.mxu0 0
        %1014 = vmatprep.subr.bf16.mxu0 0
        %1015 = vmatpush1.bf16.msra.mxu0 0
        %1016 = vmatprep.subr.bf16.mxu0 0
        %1017 = vmatpush1.bf16.msra.mxu0 0
        %1018 = vmatprep.subr.bf16.mxu0 0
        %1019 = vmatpush1.bf16.msra.mxu0 %v999
        %1020 = vmatprep.subr.bf16.mxu0 0
        %1021 = vmatpush2.bf16.msra.mxu0 0
        %1022 = vmatprep.subr.bf16.mxu0 0
        %1023 = vmatpush2.bf16.msra.mxu0 0
        %1024 = vmatprep.subr.bf16.mxu0 0
        %1025 = vmatpush2.bf16.msra.mxu0 0
        %1026 = vmatprep.subr.bf16.mxu0 0
        %1027 = vmatpush2.bf16.msra.mxu0 0
        %1028 = vmatprep.subr.bf16.mxu0 0
        %1029 = vmatpush2.bf16.msra.mxu0 0
        %1030 = vmatprep.subr.bf16.mxu0 0
        %1031 = vmatpush2.bf16.msra.mxu0 0
        %1032 = vmatprep.subr.bf16.mxu0 0
        %1033 = vmatpush2.bf16.msra.mxu0 0
        %1034 = vmatprep.subr.bf16.mxu0 0
        %1035 = vmatpush2.bf16.msra.mxu0 0
        %1036 = vmatprep.mubr.bf16.mxu0 0
        %1037 = vmatmul.mubr.bf16.gmra.mxu0 %v1002
        %v1038 = vpop.f32.mrf.mxu0
        %v1039 = vadd.f32 %v943, %v1038
        %v1040 = vpop.f32.mrf.mxu0
        %v1041 = vpop.f32.mrf.mxu0
        %v1042 = vadd.f32 %v946, %v1041
        %v1043 = vpop.f32.mrf.mxu0
        %1044 = vdwg.mxu0
        %v1045 = vpack.c.bf16 %v994, %v991
        %v1046 = vpack.c.bf16 %v1042, %v1039
        %v1047 = vld [vmem:[#allocation2] sm:$0xf]
        %v1048 = vld [vmem:[#allocation2 + $0x4] sm:$0xf]
        %v1049 = vld [vmem:[#allocation2 + $0x8] sm:$0xf]
        %v1050 = vld [vmem:[#allocation2 + $0xc] sm:$0xf]
        %v1055 = vunpack.c.l.b16 %v1047
        %v1056 = vunpack.c.l.b16 %v1048
        %v1057 = vunpack.c.l.b16 %v1049
        %v1058 = vunpack.c.l.b16 %v1050
        %v1059 = vpack.c.b16 %v1056, %v1055
        %v1060 = vpack.c.b16 %v1058, %v1057
        %v1064 = vsel %vm376, %v1045, 0
        %v1067 = vsel %vm376, %v1046, 0
        %1069 = vmatprep.subr.bf16.mxu0 0
        %1070 = vmatpush1.bf16.msra.mxu0 0
        %1071 = vmatprep.subr.bf16.mxu0 0
        %1072 = vmatpush1.bf16.msra.mxu0 0
        %1073 = vmatprep.subr.bf16.mxu0 0
        %1074 = vmatpush1.bf16.msra.mxu0 0
        %1075 = vmatprep.subr.bf16.mxu0 0
        %1076 = vmatpush1.bf16.msra.mxu0 0
        %1077 = vmatprep.subr.bf16.mxu0 0
        %1078 = vmatpush1.bf16.msra.mxu0 0
        %1079 = vmatprep.subr.bf16.mxu0 0
        %1080 = vmatpush1.bf16.msra.mxu0 0
        %1081 = vmatprep.subr.bf16.mxu0 0
        %1082 = vmatpush1.bf16.msra.mxu0 %v1060
        %1083 = vmatprep.subr.bf16.mxu0 0
        %1084 = vmatpush1.bf16.msra.mxu0 %v1059
        %1085 = vmatprep.subr.bf16.mxu0 0
        %1086 = vmatpush2.bf16.msra.mxu0 0
        %1087 = vmatprep.subr.bf16.mxu0 0
        %1088 = vmatpush2.bf16.msra.mxu0 0
        %1089 = vmatprep.subr.bf16.mxu0 0
        %1090 = vmatpush2.bf16.msra.mxu0 0
        %1091 = vmatprep.subr.bf16.mxu0 0
        %1092 = vmatpush2.bf16.msra.mxu0 0
        %1093 = vmatprep.subr.bf16.mxu0 0
        %1094 = vmatpush2.bf16.msra.mxu0 0
        %1095 = vmatprep.subr.bf16.mxu0 0
        %1096 = vmatpush2.bf16.msra.mxu0 0
        %1097 = vmatprep.subr.bf16.mxu0 0
        %1098 = vmatpush2.bf16.msra.mxu0 0
        %1099 = vmatprep.subr.bf16.mxu0 0
        %1100 = vmatpush2.bf16.msra.mxu0 0
        %1101 = vmatprep.mubr.bf16.mxu0 0
        %1102 = vmatmul.mubr.bf16.gmra.mxu0 %v1064
        %v1103 = vpop.f32.mrf.mxu0
        %v1104 = vadd.f32 0.0, %v1103
        %v1105 = vpop.f32.mrf.mxu0
        %v1106 = vpop.f32.mrf.mxu0
        %v1107 = vadd.f32 0.0, %v1106
        %v1108 = vpop.f32.mrf.mxu0
        %1109 = vmatprep.mubr.bf16.mxu0 0
        %1110 = vmatmul.mubr.bf16.gmra.mxu0 %v1067
        %v1111 = vpop.f32.mrf.mxu0
        %v1112 = vadd.f32 0.0, %v1111
        %v1113 = vpop.f32.mrf.mxu0
        %v1114 = vpop.f32.mrf.mxu0
        %v1115 = vadd.f32 0.0, %v1114
        %v1116 = vpop.f32.mrf.mxu0
        %1117 = vdwg.mxu0
        %v1118 = vadd.f32 %v370, %v1104
        %v1119 = vadd.f32 %v371, %v1107
        %v1120 = vadd.f32 %v372, %v1112
        %v1121 = vadd.f32 %v373, %v1115
        %v1122 = vld [vmem:[%s5] sm:$0x1]
        %v1123 = vld [vmem:[%s6] sm:$0x1]
        %v1124 = vsel %vm376, %v1118, 0.0
        %1125 = vadd.xlane.f32.xlu0 %v1124
        %v1126 = vpop.xlane.xlu0 %1125
        %v1127 = vsel %vm376, %v1119, 0.0
        %1128 = vadd.xlane.f32.xlu0 %v1127
        %v1129 = vpop.xlane.xlu0 %1128
        %v1130 = vsel %vm376, %v1120, 0.0
        %1131 = vadd.xlane.f32.xlu0 %v1130
        %v1132 = vpop.xlane.xlu0 %1131
        %v1133 = vsel %vm376, %v1121, 0.0
        %1134 = vadd.xlane.f32.xlu0 %v1133
        %v1135 = vpop.xlane.xlu0 %1134
        %v1136 = vmul.f32 %v1126, %v389
        %v1137 = vmul.f32 %v1129, %v389
        %v1138 = vmul.f32 %v1132, %v389
        %v1139 = vmul.f32 %v1135, %v389
        %v1140 = vsub.f32 %v1118, %v1136
        %v1141 = vsub.f32 %v1119, %v1137
        %v1142 = vsub.f32 %v1120, %v1138
        %v1143 = vsub.f32 %v1121, %v1139
        %v1144 = vmul.f32 %v1140, %v1140
        %v1145 = vmul.f32 %v1141, %v1141
        %v1146 = vmul.f32 %v1142, %v1142
        %v1147 = vmul.f32 %v1143, %v1143
        %v1148 = vsel %vm376, %v1144, 0.0
        %1149 = vadd.xlane.f32.xlu0 %v1148
        %v1150 = vpop.xlane.xlu0 %1149
        %v1151 = vsel %vm376, %v1145, 0.0
        %1152 = vadd.xlane.f32.xlu0 %v1151
        %v1153 = vpop.xlane.xlu0 %1152
        %v1154 = vsel %vm376, %v1146, 0.0
        %1155 = vadd.xlane.f32.xlu0 %v1154
        %v1156 = vpop.xlane.xlu0 %1155
        %v1157 = vsel %vm376, %v1147, 0.0
        %1158 = vadd.xlane.f32.xlu0 %v1157
        %v1159 = vpop.xlane.xlu0 %1158
        %v1160 = vmul.f32 %v1150, %v389
        %v1161 = vmul.f32 %v1153, %v389
        %v1162 = vmul.f32 %v1156, %v389
        %v1163 = vmul.f32 %v1159, %v389
        %v1164 = vadd.f32 %v1160, 1e-05
        %v1165 = vadd.f32 %v1161, 1e-05
        %v1166 = vadd.f32 %v1162, 1e-05
        %v1167 = vadd.f32 %v1163, 1e-05
        %v1168 = vrsqrt.pop %v1164
        %v1169 = vrsqrt.pop %v1165
        %v1170 = vrsqrt.pop %v1166
        %v1171 = vrsqrt.pop %v1167
        %v1172 = vmul.f32 %v1140, %v1168
        %v1173 = vmul.f32 %v1141, %v1169
        %v1174 = vmul.f32 %v1142, %v1170
        %v1175 = vmul.f32 %v1143, %v1171
        %v1177 = vlaneseq
        %v1178 = vshrl.u32 %v1177, 7
        %v1179 = vsub.s32 0, %v1178
        %v1180 = vrot.slane %v1122, %v1179
        %v1182 = vmul.f32 %v1172, %v1180
        %v1183 = vmul.f32 %v1173, %v1180
        %v1184 = vmul.f32 %v1174, %v1180
        %v1185 = vmul.f32 %v1175, %v1180
        %v1187 = vlaneseq
        %v1188 = vshrl.u32 %v1187, 7
        %v1189 = vsub.s32 0, %v1188
        %v1190 = vrot.slane %v1123, %v1189
        %v1192 = vadd.f32 %v1182, %v1190
        %v1193 = vadd.f32 %v1183, %v1190
        %v1194 = vadd.f32 %v1184, %v1190
        %v1195 = vadd.f32 %v1185, %v1190
        %v1196 = vpack.c.bf16 %v1193, %v1192
        %v1197 = vpack.c.bf16 %v1195, %v1194
        %v1198 = vld [vmem:[#allocation5] sm:$0xf]
        %v1199 = vld [vmem:[#allocation5 + $0x4] sm:$0xf]
        %v1200 = vld [vmem:[#allocation5 + $0x8] sm:$0xf]
        %v1201 = vld [vmem:[#allocation5 + $0xc] sm:$0xf]
        %v1206 = vunpack.c.l.b16 %v1198
        %v1207 = vunpack.c.l.b16 %v1199
        %v1208 = vunpack.c.l.b16 %v1200
        %v1209 = vunpack.c.l.b16 %v1201
        %v1210 = vpack.c.b16 %v1207, %v1206
        %v1211 = vpack.c.b16 %v1209, %v1208
        %v1215 = vsel %vm376, %v1196, 0
        %v1218 = vsel %vm376, %v1197, 0
        %1220 = vmatprep.subr.bf16.mxu0 0
        %1221 = vmatpush1.bf16.msra.mxu0 0
        %1222 = vmatprep.subr.bf16.mxu0 0
        %1223 = vmatpush1.bf16.msra.mxu0 0
        %1224 = vmatprep.subr.bf16.mxu0 0
        %1225 = vmatpush1.bf16.msra.mxu0 0
        %1226 = vmatprep.subr.bf16.mxu0 0
        %1227 = vmatpush1.bf16.msra.mxu0 0
        %1228 = vmatprep.subr.bf16.mxu0 0
        %1229 = vmatpush1.bf16.msra.mxu0 0
        %1230 = vmatprep.subr.bf16.mxu0 0
        %1231 = vmatpush1.bf16.msra.mxu0 0
        %1232 = vmatprep.subr.bf16.mxu0 0
        %1233 = vmatpush1.bf16.msra.mxu0 %v1211
        %1234 = vmatprep.subr.bf16.mxu0 0
        %1235 = vmatpush1.bf16.msra.mxu0 %v1210
        %1236 = vmatprep.subr.bf16.mxu0 0
        %1237 = vmatpush2.bf16.msra.mxu0 0
        %1238 = vmatprep.subr.bf16.mxu0 0
        %1239 = vmatpush2.bf16.msra.mxu0 0
        %1240 = vmatprep.subr.bf16.mxu0 0
        %1241 = vmatpush2.bf16.msra.mxu0 0
        %1242 = vmatprep.subr.bf16.mxu0 0
        %1243 = vmatpush2.bf16.msra.mxu0 0
        %1244 = vmatprep.subr.bf16.mxu0 0
        %1245 = vmatpush2.bf16.msra.mxu0 0
        %1246 = vmatprep.subr.bf16.mxu0 0
        %1247 = vmatpush2.bf16.msra.mxu0 0
        %1248 = vmatprep.subr.bf16.mxu0 0
        %1249 = vmatpush2.bf16.msra.mxu0 0
        %1250 = vmatprep.subr.bf16.mxu0 0
        %1251 = vmatpush2.bf16.msra.mxu0 0
        %1252 = vmatprep.mubr.bf16.mxu0 0
        %1253 = vmatmul.mubr.bf16.gmra.mxu0 %v1215
        %v1254 = vpop.f32.mrf.mxu0
        %v1255 = vadd.f32 0.0, %v1254
        %v1256 = vpop.f32.mrf.mxu0
        %v1257 = vpop.f32.mrf.mxu0
        %v1258 = vadd.f32 0.0, %v1257
        %v1259 = vpop.f32.mrf.mxu0
        %1260 = vmatprep.mubr.bf16.mxu0 0
        %1261 = vmatmul.mubr.bf16.gmra.mxu0 %v1218
        %v1262 = vpop.f32.mrf.mxu0
        %v1263 = vadd.f32 0.0, %v1262
        %v1264 = vpop.f32.mrf.mxu0
        %v1265 = vpop.f32.mrf.mxu0
        %v1266 = vadd.f32 0.0, %v1265
        %v1267 = vpop.f32.mrf.mxu0
        %1268 = vdwg.mxu0
        %v1269 = vmul.f32 %v1255, 0.70710677
        %v1270 = vmul.f32 %v1258, 0.70710677
        %v1271 = vmul.f32 %v1263, 0.70710677
        %v1272 = vmul.f32 %v1266, 0.70710677
        %v1273 = vand.u32 2147483647, %v1269
        %v1274 = vand.u32 2147483647, %v1270
        %v1275 = vand.u32 2147483647, %v1271
        %v1276 = vand.u32 2147483647, %v1272
        %v1277 = vmul.f32 %v1273, 0.3275911
        %v1278 = vmul.f32 %v1274, 0.3275911
        %v1279 = vmul.f32 %v1275, 0.3275911
        %v1280 = vmul.f32 %v1276, 0.3275911
        %v1281 = vadd.f32 %v1277, 1.0
        %v1282 = vadd.f32 %v1278, 1.0
        %v1283 = vadd.f32 %v1279, 1.0
        %v1284 = vadd.f32 %v1280, 1.0
        %v1285 = vrcp.pop %v1281
        %v1286 = vmul.f32 1.0, %v1285
        %v1287 = vrcp.pop %v1282
        %v1288 = vmul.f32 1.0, %v1287
        %v1289 = vrcp.pop %v1283
        %v1290 = vmul.f32 1.0, %v1289
        %v1291 = vrcp.pop %v1284
        %v1292 = vmul.f32 1.0, %v1291
        %v1293 = vmul.f32 %v1286, 1.0614054
        %v1294 = vmul.f32 %v1288, 1.0614054
        %v1295 = vmul.f32 %v1290, 1.0614054
        %v1296 = vmul.f32 %v1292, 1.0614054
        %v1297 = vadd.f32 %v1293, -1.4531521
        %v1298 = vadd.f32 %v1294, -1.4531521
        %v1299 = vadd.f32 %v1295, -1.4531521
        %v1300 = vadd.f32 %v1296, -1.4531521
        %v1301 = vmul.f32 %v1286, %v1297
        %v1302 = vmul.f32 %v1288, %v1298
        %v1303 = vmul.f32 %v1290, %v1299
        %v1304 = vmul.f32 %v1292, %v1300
        %v1305 = vadd.f32 %v1301, 1.4214138
        %v1306 = vadd.f32 %v1302, 1.4214138
        %v1307 = vadd.f32 %v1303, 1.4214138
        %v1308 = vadd.f32 %v1304, 1.4214138
        %v1309 = vmul.f32 %v1286, %v1305
        %v1310 = vmul.f32 %v1288, %v1306
        %v1311 = vmul.f32 %v1290, %v1307
        %v1312 = vmul.f32 %v1292, %v1308
        %v1313 = vadd.f32 %v1309, -0.28449672
        %v1314 = vadd.f32 %v1310, -0.28449672
        %v1315 = vadd.f32 %v1311, -0.28449672
        %v1316 = vadd.f32 %v1312, -0.28449672
        %v1317 = vmul.f32 %v1286, %v1313
        %v1318 = vmul.f32 %v1288, %v1314
        %v1319 = vmul.f32 %v1290, %v1315
        %v1320 = vmul.f32 %v1292, %v1316
        %v1321 = vadd.f32 %v1317, 0.2548296
        %v1322 = vadd.f32 %v1318, 0.2548296
        %v1323 = vadd.f32 %v1319, 0.2548296
        %v1324 = vadd.f32 %v1320, 0.2548296
        %v1325 = vmul.f32 %v1286, %v1321
        %v1326 = vmul.f32 %v1288, %v1322
        %v1327 = vmul.f32 %v1290, %v1323
        %v1328 = vmul.f32 %v1292, %v1324
        %v1329 = vsub.f32 0.0, %v1273
        %v1330 = vsub.f32 0.0, %v1274
        %v1331 = vsub.f32 0.0, %v1275
        %v1332 = vsub.f32 0.0, %v1276
        %v1333 = vmul.f32 %v1329, %v1273
        %v1334 = vmul.f32 %v1330, %v1274
        %v1335 = vmul.f32 %v1331, %v1275
        %v1336 = vmul.f32 %v1332, %v1276
        %v1337 = vmul.f32 %v1333, 1.442695
        %v1338 = vpow.pop %v1337
        %v1339 = vmul.f32 %v1334, 1.442695
        %v1340 = vpow.pop %v1339
        %v1341 = vmul.f32 %v1335, 1.442695
        %v1342 = vpow.pop %v1341
        %v1343 = vmul.f32 %v1336, 1.442695
        %v1344 = vpow.pop %v1343
        %v1345 = vmul.f32 %v1325, %v1338
        %v1346 = vmul.f32 %v1326, %v1340
        %v1347 = vmul.f32 %v1327, %v1342
        %v1348 = vmul.f32 %v1328, %v1344
        %v1349 = vsub.f32 1.0, %v1345
        %v1350 = vsub.f32 1.0, %v1346
        %v1351 = vsub.f32 1.0, %v1347
        %v1352 = vsub.f32 1.0, %v1348
        %vm1353 = vcmp.ge.f32.partialorder %v1269, 0.0
        %vm1354 = vcmp.ge.f32.partialorder %v1270, 0.0
        %vm1355 = vcmp.ge.f32.partialorder %v1271, 0.0
        %vm1356 = vcmp.ge.f32.partialorder %v1272, 0.0
        %v1357 = vsub.f32 0.0, %v1349
        %v1358 = vsub.f32 0.0, %v1350
        %v1359 = vsub.f32 0.0, %v1351
        %v1360 = vsub.f32 0.0, %v1352
        %v1361 = vsel %vm1353, %v1349, %v1357
        %v1362 = vsel %vm1354, %v1350, %v1358
        %v1363 = vsel %vm1355, %v1351, %v1359
        %v1364 = vsel %vm1356, %v1352, %v1360
        %v1365 = vmul.f32 %v1255, 0.5
        %v1366 = vmul.f32 %v1258, 0.5
        %v1367 = vmul.f32 %v1263, 0.5
        %v1368 = vmul.f32 %v1266, 0.5
        %v1369 = vadd.f32 %v1361, 1.0
        %v1370 = vadd.f32 %v1362, 1.0
        %v1371 = vadd.f32 %v1363, 1.0
        %v1372 = vadd.f32 %v1364, 1.0
        %v1373 = vmul.f32 %v1365, %v1369
        %v1374 = vmul.f32 %v1366, %v1370
        %v1375 = vmul.f32 %v1367, %v1371
        %v1376 = vmul.f32 %v1368, %v1372
        %v1377 = vpack.c.bf16 %v1374, %v1373
        %v1378 = vpack.c.bf16 %v1376, %v1375
        %v1379 = vld [vmem:[%s8] sm:$0xf]
        %v1380 = vld [vmem:[%s8 + $0x4] sm:$0xf]
        %v1381 = vld [vmem:[%s8 + $0x8] sm:$0xf]
        %v1382 = vld [vmem:[%s8 + $0xc] sm:$0xf]
        %v1383 = vld [vmem:[%s8 + $0x10] sm:$0xf]
        %v1384 = vld [vmem:[%s8 + $0x14] sm:$0xf]
        %v1385 = vld [vmem:[%s8 + $0x18] sm:$0xf]
        %v1386 = vld [vmem:[%s8 + $0x1c] sm:$0xf]
        %v1387 = vld [vmem:[%s8 + $0x20] sm:$0xf]
        %v1388 = vld [vmem:[%s8 + $0x24] sm:$0xf]
        %v1389 = vld [vmem:[%s8 + $0x28] sm:$0xf]
        %v1390 = vld [vmem:[%s8 + $0x2c] sm:$0xf]
        %v1391 = vld [vmem:[%s8 + $0x30] sm:$0xf]
        %v1392 = vld [vmem:[%s8 + $0x34] sm:$0xf]
        %v1393 = vld [vmem:[%s8 + $0x38] sm:$0xf]
        %v1394 = vld [vmem:[%s8 + $0x3c] sm:$0xf]
        %v1411 = vunpack.c.l.b16 %v1379
        %v1412 = vunpack.c.l.b16 %v1380
        %v1413 = vunpack.c.l.b16 %v1381
        %v1414 = vunpack.c.l.b16 %v1382
        %v1415 = vunpack.c.l.b16 %v1383
        %v1416 = vunpack.c.l.b16 %v1384
        %v1417 = vunpack.c.l.b16 %v1385
        %v1418 = vunpack.c.l.b16 %v1386
        %v1419 = vunpack.c.l.b16 %v1387
        %v1420 = vunpack.c.l.b16 %v1388
        %v1421 = vunpack.c.l.b16 %v1389
        %v1422 = vunpack.c.l.b16 %v1390
        %v1423 = vunpack.c.l.b16 %v1391
        %v1424 = vunpack.c.l.b16 %v1392
        %v1425 = vunpack.c.l.b16 %v1393
        %v1426 = vunpack.c.l.b16 %v1394
        %v1427 = vpack.c.b16 %v1412, %v1411
        %v1428 = vpack.c.b16 %v1414, %v1413
        %v1429 = vpack.c.b16 %v1416, %v1415
        %v1430 = vpack.c.b16 %v1418, %v1417
        %v1431 = vpack.c.b16 %v1420, %v1419
        %v1432 = vpack.c.b16 %v1422, %v1421
        %v1433 = vpack.c.b16 %v1424, %v1423
        %v1434 = vpack.c.b16 %v1426, %v1425
        %1443 = vmatprep.subr.bf16.mxu0 0
        %1444 = vmatpush1.bf16.msra.mxu0 %v1434
        %1445 = vmatprep.subr.bf16.mxu0 0
        %1446 = vmatpush1.bf16.msra.mxu0 %v1433
        %1447 = vmatprep.subr.bf16.mxu0 0
        %1448 = vmatpush1.bf16.msra.mxu0 %v1432
        %1449 = vmatprep.subr.bf16.mxu0 0
        %1450 = vmatpush1.bf16.msra.mxu0 %v1431
        %1451 = vmatprep.subr.bf16.mxu0 0
        %1452 = vmatpush1.bf16.msra.mxu0 %v1430
        %1453 = vmatprep.subr.bf16.mxu0 0
        %1454 = vmatpush1.bf16.msra.mxu0 %v1429
        %1455 = vmatprep.subr.bf16.mxu0 0
        %1456 = vmatpush1.bf16.msra.mxu0 %v1428
        %1457 = vmatprep.subr.bf16.mxu0 0
        %1458 = vmatpush1.bf16.msra.mxu0 %v1427
        %1459 = vmatprep.subr.bf16.mxu0 0
        %1460 = vmatpush2.bf16.msra.mxu0 0
        %1461 = vmatprep.subr.bf16.mxu0 0
        %1462 = vmatpush2.bf16.msra.mxu0 0
        %1463 = vmatprep.subr.bf16.mxu0 0
        %1464 = vmatpush2.bf16.msra.mxu0 0
        %1465 = vmatprep.subr.bf16.mxu0 0
        %1466 = vmatpush2.bf16.msra.mxu0 0
        %1467 = vmatprep.subr.bf16.mxu0 0
        %1468 = vmatpush2.bf16.msra.mxu0 0
        %1469 = vmatprep.subr.bf16.mxu0 0
        %1470 = vmatpush2.bf16.msra.mxu0 0
        %1471 = vmatprep.subr.bf16.mxu0 0
        %1472 = vmatpush2.bf16.msra.mxu0 0
        %1473 = vmatprep.subr.bf16.mxu0 0
        %1474 = vmatpush2.bf16.msra.mxu0 0
        %1475 = vmatprep.mubr.bf16.mxu0 0
        %1476 = vmatmul.mubr.bf16.gmra.mxu0 %v1377
        %v1477 = vpop.f32.mrf.mxu0
        %v1478 = vadd.f32 0.0, %v1477
        %v1479 = vpop.f32.mrf.mxu0
        %v1480 = vpop.f32.mrf.mxu0
        %v1481 = vadd.f32 0.0, %v1480
        %v1482 = vpop.f32.mrf.mxu0
        %1483 = vmatprep.mubr.bf16.mxu0 0
        %1484 = vmatmul.mubr.bf16.gmra.mxu0 %v1378
        %v1485 = vpop.f32.mrf.mxu0
        %v1486 = vadd.f32 0.0, %v1485
        %v1487 = vpop.f32.mrf.mxu0
        %v1488 = vpop.f32.mrf.mxu0
        %v1489 = vadd.f32 0.0, %v1488
        %v1490 = vpop.f32.mrf.mxu0
        %1491 = vdwg.mxu0
        %v1492 = vadd.f32 %v1118, %v1478
        %v1493 = vadd.f32 %v1119, %v1481
        %v1494 = vadd.f32 %v1120, %v1486
        %v1495 = vadd.f32 %v1121, %v1489
        %1496 = vst.msk [vmem:[%s358] sm:$0xff] %vm376, %v1492
        %1497 = vst.msk [vmem:[%s358 + $0x8] sm:$0xff] %vm376, %v1493
        %1498 = vst.msk [vmem:[%s358 + $0x10] sm:$0xff] %vm376, %v1494
        %1499 = vst.msk [vmem:[%s358 + $0x18] sm:$0xff] %vm376, %v1495
        %s1500 = sand.u32 %s227, 1
        %s1501 = scalar_lea.sflag [#allocation4], %s1500
        %s1502 = sand.u32 %s227, 1
        %s1503 = smul.addr %s1502, 32
        %s1504 = scalar_lea.vmem [#allocation7], %s1503
        // Predicated region
        $region65: #{tpu_custom_call.1} parent=55 // pred_check
          %p1505 = pneg %p237
        $region66: #{tpu_custom_call.1} parent=55 // pred_check_branch
          %1507 = sbr.rel (%p1505) target = $region68
        $region67: #{tpu_custom_call.1} parent=55 // pred_region
          %s1508 = smul.u32 2, %s25
          %s1510 = ssub.s32 512, 512
          %1511 = vsyncadd %s1501, %s1510
          %s1512 = smul.addr %s1508, 2
          %s1513 = smul.addr %s1512, 128
          %s1514 = scalar_lea.hbm %s9, %s1513
          %s1515 = sshll.u32 %s1504, 4
          %s1516 = int_to_ptr.vmem [resolvable:$true] %s1515
          %1521 = dma.vmem_to_hbm [thread:$0]  %s1516, 512, %s1514, %s1501, 128, 128, 8
        $region68: #{tpu_custom_call.1} parent=55 // pred_fallthru
          _
      $region56: #{tpu_custom_call.1} parent=5 // pred_fallthru
        _
      %p1522 = scmp.le.s32.totalorder 2, %s20
      // Predicated region
      $region69: #{tpu_custom_call.1} parent=5 // pred_check
        %p1523 = pneg %p1522
      $region70: #{tpu_custom_call.1} parent=5 // pred_check_branch
        %1525 = sbr.rel (%p1523) target = $region72
      $region71: #{tpu_custom_call.1} parent=5 // pred_region
        %s1526 = ssub.s32 %s20, 2
        // Predicated region
        $region73: #{tpu_custom_call.1} parent=71 // pred_check
          %p1527 = pneg %p243
        $region74: #{tpu_custom_call.1} parent=71 // pred_check_branch
          %1529 = sbr.rel (%p1527) target = $region76
        $region75: #{tpu_custom_call.1} parent=71 // pred_region
          %s1530 = sand.u32 %s228, 1
          %s1531 = scalar_lea.sflag [#allocation4], %s1530
          %s1532 = sand.u32 %s228, 1
          %s1533 = smul.addr %s1532, 32
          %s1534 = scalar_lea.vmem [#allocation7], %s1533
          %1535 = dma.done %s1531, 512
        $region76: #{tpu_custom_call.1} parent=71 // pred_fallthru
          _
      $region72: #{tpu_custom_call.1} parent=5 // pred_fallthru
        _
    $region6: #{tpu_custom_call.1} parent=1 // loop_footer
      %s24 = sadd.s32 1, %s20
    $region7: #{tpu_custom_call.1} parent=1 // loop_footer_branch
      %19 = sbr.rel target = $region3
    $region8: #{tpu_custom_call.1} parent=1 // loop_exit
      _
    %1536 = vsyncpa [#allocation3], 1
    %s1537 = scalar_lea.sflag [#allocation3], 1
    %1538 = vsyncpa %s1537, 1
    %1539 = vsyncpa [#allocation6], 1
    %1540 = vsyncpa [#allocation4], 1
    %s1541 = scalar_lea.sflag [#allocation4], 1
    %1542 = vsyncpa %s1541, 1

</llo_original>
